<compile_context>
chip_gen: v7x
topology: tpu7x:2x2x1
jax: 0.10.0
libtpu: 0.0.40
codegen_flags: <defaults>
</compile_context>

<pallas_src>
import functools
import math

import numpy as np
import jax
import jax.numpy as jnp
from jax.experimental import pallas as pl
from jax.experimental.pallas import tpu as pltpu


# ----------------------------------------------------------------------------- helpers
def _round_up(x: int, m: int) -> int:
    return (x + m - 1) // m * m


def _pad2d(a, rows, cols):
    r, c = a.shape
    if r == rows and c == cols:
        return a
    return jnp.pad(a, ((0, rows - r), (0, cols - c)))


def _tpu_defaults():
    """Per-generation (tm, tk, th, vmem_limit_bytes) defaults."""
    try:
        kind = jax.devices()[0].device_kind.lower()
    except Exception:
        kind = ""
    if "v6" in kind:                       # 128 MiB VMEM: big tiles, raise scoped limit
        return 512, 1024, 1024, 64 * 1024 * 1024
    if "v5" in kind:                       # 16 MiB default scoped limit -> raise it
        return 256, 512, 512, 64 * 1024 * 1024
    if "v7" in kind or "7x" in kind:       # 64 MiB physical per TC: stay conservative
        return 256, 512, 512, 48 * 1024 * 1024
    return 256, 512, 512, None


_TM, _TK, _TH, _VMEM = _tpu_defaults()


def _pick_tm(M, tm):
    """Clamp the row tile; keep >=2 M-blocks when possible (v7x megacore)."""
    tm = min(tm, _round_up(M, 8))
    if _round_up(M, tm) // tm < 2 and tm > 8:
        tm = _round_up(tm // 2, 8)
    return tm


def _pick_div(total, t):
    """Largest multiple of 128 <= t that divides `total` (total is a 128 multiple)."""
    t = min(t, total)
    while total % t != 0:
        t -= 128
    return t


# -----------------------------------------------------------------------------
# Kernel 1a: linear, bf16/any-dtype output, f32 scratch accumulator (used for the
# fused QKV projection whose output is bf16).
#   grid = (M tiles [parallel], K tiles [arbitrary reduction])
# -----------------------------------------------------------------------------
def _linear_acc_kernel(x_ref, w_ref, b_ref, o_ref, acc_ref):
    k = pl.program_id(1)

    @pl.when(k == 0)
    def _():
        acc_ref[...] = jnp.zeros_like(acc_ref)

    acc_ref[...] += jnp.dot(x_ref[...], w_ref[...],
                            preferred_element_type=jnp.float32)

    @pl.when(k == pl.num_programs(1) - 1)
    def _():
        o_ref[...] = (acc_ref[...] + b_ref[...]).astype(o_ref.dtype)


# -----------------------------------------------------------------------------
# Kernel 1b: linear with fused residual add, f32 output.  Accumulates directly
# into the resident output block (no scratch).  finalize: out += bias + residual.
# -----------------------------------------------------------------------------
def _linear_res_kernel(x_ref, w_ref, b_ref, r_ref, o_ref):
    k = pl.program_id(1)

    @pl.when(k == 0)
    def _():
        o_ref[...] = jnp.zeros_like(o_ref)

    o_ref[...] += jnp.dot(x_ref[...], w_ref[...],
                          preferred_element_type=jnp.float32)

    @pl.when(k == pl.num_programs(1) - 1)
    def _():
        o_ref[...] += b_ref[...] + r_ref[...]


def linear_pallas(x, w, b, *, residual=None, out_dtype=jnp.float32,
                  tm=None, tk=None):
    """x: (M, K) bf16, K multiple of 128.  w: (K, N) bf16, N multiple of 128.
    b: (1, N) f32.  residual: optional (M, N) f32 added at finalize (f32 output).
    Returns (M, N)."""
    M, K = x.shape
    N = w.shape[1]
    tm = _pick_tm(M, _TM if tm is None else tm)
    tk = _pick_div(K, _TK if tk is None else tk)
    M_pad = _round_up(M, tm)

    xp = x if M_pad == M else jnp.pad(x, ((0, M_pad - M), (0, 0)))
    grid = (M_pad // tm, K // tk)
    cparams = pltpu.CompilerParams(
        dimension_semantics=("parallel", "arbitrary"),
        vmem_limit_bytes=_VMEM)

    if residual is not None:
        rp = residual if M_pad == M else jnp.pad(residual, ((0, M_pad - M), (0, 0)))
        out = pl.pallas_call(
            _linear_res_kernel,
            out_shape=jax.ShapeDtypeStruct((M_pad, N), jnp.float32),
            grid_spec=pltpu.PrefetchScalarGridSpec(
                num_scalar_prefetch=0,
                grid=grid,
                in_specs=[
                    pl.BlockSpec((tm, tk), lambda i, k: (i, k)),
                    pl.BlockSpec((tk, N), lambda i, k: (k, 0)),
                    pl.BlockSpec((1, N), lambda i, k: (0, 0)),
                    pl.BlockSpec((tm, N), lambda i, k: (i, 0)),   # residual (finalize)
                ],
                out_specs=pl.BlockSpec((tm, N), lambda i, k: (i, 0)),
            ),
            compiler_params=cparams,
        )(xp, w, b, rp)
    else:
        out = pl.pallas_call(
            _linear_acc_kernel,
            out_shape=jax.ShapeDtypeStruct((M_pad, N), out_dtype),
            grid_spec=pltpu.PrefetchScalarGridSpec(
                num_scalar_prefetch=0,
                grid=grid,
                in_specs=[
                    pl.BlockSpec((tm, tk), lambda i, k: (i, k)),
                    pl.BlockSpec((tk, N), lambda i, k: (k, 0)),
                    pl.BlockSpec((1, N), lambda i, k: (0, 0)),
                ],
                out_specs=pl.BlockSpec((tm, N), lambda i, k: (i, 0)),
                scratch_shapes=[pltpu.VMEM((tm, N), jnp.float32)],
            ),
            compiler_params=cparams,
        )(xp, w, b)
    return out[:M]


# -----------------------------------------------------------------------------
# Kernel 2: fused Feed_Forward with fused residual:
#   out = x + relu(x @ W1 + b1) @ W2 + b2
# x (f32) doubles as matmul input (cast to bf16 in-kernel) and residual.
# Hidden dim streamed through VMEM in th-wide tiles; output block is the f32
# accumulator (no scratch); b2 + residual added exactly once at finalize.
# -----------------------------------------------------------------------------
def _ffn_kernel(x_ref, w1_ref, b1_ref, w2_ref, b2_ref, o_ref):
    h = pl.program_id(1)

    @pl.when(h == 0)
    def _():
        o_ref[...] = jnp.zeros_like(o_ref)

    hidden = jnp.dot(x_ref[...].astype(w1_ref.dtype), w1_ref[...],
                     preferred_element_type=jnp.float32)
    hidden = jnp.maximum(hidden + b1_ref[...], 0.0)
    o_ref[...] += jnp.dot(hidden.astype(w2_ref.dtype), w2_ref[...],
                          preferred_element_type=jnp.float32)

    @pl.when(h == pl.num_programs(1) - 1)
    def _():
        o_ref[...] += b2_ref[...] + x_ref[...]      # fused bias + residual add


def feed_forward_pallas(x, w1, b1, w2, b2, *, tm=None, th=None):
    """x: (M, D_pad) f32 (matmul input AND residual).  w1: (D_pad, H_pad) bf16,
    w2: (H_pad, D_pad) bf16, b1: (1, H_pad) f32, b2: (1, D_pad) f32.
    Returns (M, D_pad) f32 = x + relu(x@w1+b1)@w2 + b2."""
    M, Dp = x.shape
    Hp = w1.shape[1]
    tm = _pick_tm(M, _TM if tm is None else tm)
    th = _pick_div(Hp, _TH if th is None else th)
    M_pad = _round_up(M, tm)

    xp = x if M_pad == M else jnp.pad(x, ((0, M_pad - M), (0, 0)))

    out = pl.pallas_call(
        _ffn_kernel,
        out_shape=jax.ShapeDtypeStruct((M_pad, Dp), jnp.float32),
        grid_spec=pltpu.PrefetchScalarGridSpec(
            num_scalar_prefetch=0,
            grid=(M_pad // tm, Hp // th),     # M first (parallel), H last (reduction)
            in_specs=[
                pl.BlockSpec((tm, Dp), lambda i, j: (i, 0)),   # x row tile (resident)
                pl.BlockSpec((Dp, th), lambda i, j: (0, j)),   # W1 H-tile (streamed)
                pl.BlockSpec((1, th), lambda i, j: (0, j)),    # b1 H-tile
                pl.BlockSpec((th, Dp), lambda i, j: (j, 0)),   # W2 H-tile (streamed)
                pl.BlockSpec((1, Dp), lambda i, j: (0, 0)),    # b2 (finalize only)
            ],
            out_specs=pl.BlockSpec((tm, Dp), lambda i, j: (i, 0)),
        ),
        compiler_params=pltpu.CompilerParams(
            dimension_semantics=("parallel", "arbitrary"),
            vmem_limit_bytes=_VMEM),
    )(xp, w1, b1, w2, b2)
    return out[:M]


# -----------------------------------------------------------------------------
# Kernel 3: attention core  (Q K^T * norm_fact) V  over G (head*batch) slabs per
# grid step; NO softmax, exactly as in the reference module.  bf16 in / bf16 out.
# -----------------------------------------------------------------------------
def _attn_core_kernel(q_ref, k_ref, v_ref, o_ref, *, scale):
    s = jnp.einsum("gsd,gtd->gst", q_ref[...], k_ref[...],
                   preferred_element_type=jnp.float32) * scale
    o_ref[...] = jnp.einsum("gst,gtd->gsd", s.astype(v_ref.dtype), v_ref[...],
                            preferred_element_type=jnp.float32).astype(o_ref.dtype)


def attention_core_pallas(q3, k3, v3, scale, *, g=8):
    """q3/k3/v3: (hb, S, dh) bf16.  Returns (hb, S, dh) bf16."""
    hb, S, dh = q3.shape
    g = max(1, min(g, hb))
    if hb // g < 2 and g > 1:        # keep >=2 parallel grid steps (v7x megacore)
        g = max(1, g // 2)
    hb_pad = _round_up(hb, g)
    if hb_pad != hb:
        pad = ((0, hb_pad - hb), (0, 0), (0, 0))
        q3 = jnp.pad(q3, pad); k3 = jnp.pad(k3, pad); v3 = jnp.pad(v3, pad)

    kernel = functools.partial(_attn_core_kernel, scale=scale)
    out = pl.pallas_call(
        kernel,
        out_shape=jax.ShapeDtypeStruct((hb_pad, S, dh), jnp.bfloat16),
        grid_spec=pltpu.PrefetchScalarGridSpec(
            num_scalar_prefetch=0,
            grid=(hb_pad // g,),
            in_specs=[pl.BlockSpec((g, S, dh), lambda i: (i, 0, 0)) for _ in range(3)],
            out_specs=pl.BlockSpec((g, S, dh), lambda i: (i, 0, 0)),
        ),
        compiler_params=pltpu.CompilerParams(dimension_semantics=("parallel",)),
    )(q3, k3, v3)
    return out[:hb]


# -----------------------------------------------------------------------------
# Kernel 4: LayerNorm over the trailing (S, D) dims (gamma=1, beta=0, eps=1e-5).
# The residual add is already fused into the producing matmul kernels, so this
# takes a single pre-summed input.
# -----------------------------------------------------------------------------
def _ln_kernel(s_ref, o_ref):
    s = s_ref[...]                                  # (1, S, D) f32
    n = s.shape[1] * s.shape[2]
    tot = jnp.sum(jnp.sum(s, axis=-1, keepdims=True), axis=-2, keepdims=True)
    mean = tot / n
    c = s - mean
    var = jnp.sum(jnp.sum(c * c, axis=-1, keepdims=True), axis=-2, keepdims=True) / n
    o_ref[...] = c * jax.lax.rsqrt(var + 1e-5)


def layernorm_pallas(s):
    B, S, D = s.shape
    return pl.pallas_call(
        _ln_kernel,
        out_shape=jax.ShapeDtypeStruct((B, S, D), jnp.float32),
        grid_spec=pltpu.PrefetchScalarGridSpec(
            num_scalar_prefetch=0,
            grid=(B,),
            in_specs=[pl.BlockSpec((1, S, D), lambda b: (b, 0, 0))],
            out_specs=pl.BlockSpec((1, S, D), lambda b: (b, 0, 0)),
        ),
        compiler_params=pltpu.CompilerParams(dimension_semantics=("parallel",)),
    )(s.astype(jnp.float32))


# -----------------------------------------------------------------------------
# Encoder forward (positional encoding + attention + AddNorm + FFN + AddNorm)
# -----------------------------------------------------------------------------
def positional_encoding(seq_len: int, d: int):
    pos = np.arange(seq_len, dtype=np.float64)[:, None]
    i = np.arange(d, dtype=np.float64)[None, :]
    angle = pos / np.power(10000.0, 2.0 * i / d)
    pe = np.where(i % 2 == 0, np.sin(angle), np.cos(angle))
    return jnp.asarray(pe, dtype=jnp.float32)


def encoder_forward(x, pp):
    """x: (B, S, D) f32.  pp: prepared (pre-padded, bf16) params."""
    B, S, D = x.shape
    D_pad = _round_up(D, 128)
    n_heads = max(1, D // 32)           # Mutihead_Attention(d, d, d, d // 32)
    dh = D // n_heads
    hb = n_heads * B
    M = B * S
    scale = 1.0 / math.sqrt(D)          # norm_fact = 1 / sqrt(d_model)

    x = x + positional_encoding(S, D)[None]
    x2p = jnp.pad(x.reshape(M, D), ((0, 0), (0, D_pad - D)))        # (M, D_pad) f32

    # ---- fused q|k|v projection (one HBM pass over x), bf16 output ----
    qkv = linear_pallas(x2p.astype(jnp.bfloat16), pp["wqkv"], pp["bqkv"],
                        out_dtype=jnp.bfloat16)                      # (M, 3*D_pad) bf16
    q = qkv[:, 0 * D_pad: 0 * D_pad + D]
    k = qkv[:, 1 * D_pad: 1 * D_pad + D]
    v = qkv[:, 2 * D_pad: 2 * D_pad + D]
    # Reference's quirky FLAT head split: reshape(-1, B, S, dh) on a contiguous
    # (B, S, D) buffer; same flat buffer as (h*B, S, dh).
    q3 = q.reshape(hb, S, dh)
    k3 = k.reshape(hb, S, dh)
    v3 = v.reshape(hb, S, dh)

    attn = attention_core_pallas(q3, k3, v3, scale)                  # (hb, S, dh) bf16
    attn2p = jnp.pad(attn.reshape(M, D), ((0, 0), (0, D_pad - D)))   # flat merge, bf16

    # ---- o-projection with fused residual add: x + o(attn) (dropout = identity) ----
    sum1 = linear_pallas(attn2p, pp["wo"], pp["bo"], residual=x2p)   # (M, D_pad) f32
    h1 = layernorm_pallas(sum1[:, :D].reshape(B, S, D))              # Add & Norm 1

    # ---- Feed_Forward with fused residual add: h1 + ffn(h1) ----
    h1p = jnp.pad(h1.reshape(M, D), ((0, 0), (0, D_pad - D)))        # (M, D_pad) f32
    sum2 = feed_forward_pallas(h1p, pp["w1"], pp["b1"], pp["w2"], pp["b2"])

    return layernorm_pallas(sum2[:, :D].reshape(B, S, D))            # Add & Norm 2


# -----------------------------------------------------------------------------
# Parameter init (nn.Linear defaults: uniform +-1/sqrt(fan_in)), pre-transposed
# ((in, out)), plus one-time pad/cast preparation for the kernels.
# -----------------------------------------------------------------------------
def _linear_init(key, fan_in, fan_out):
    kw, kb = jax.random.split(key)
    bound = 1.0 / math.sqrt(fan_in)
    w = jax.random.uniform(kw, (fan_in, fan_out), jnp.float32, -bound, bound)
    b = jax.random.uniform(kb, (fan_out,), jnp.float32, -bound, bound)
    return w, b


def init_encoder_params(key, d):
    ks = jax.random.split(key, 6)
    wq, bq = _linear_init(ks[0], d, d)
    wk, bk = _linear_init(ks[1], d, d)
    wv, bv = _linear_init(ks[2], d, d)
    wo, bo = _linear_init(ks[3], d, d)
    w1, b1 = _linear_init(ks[4], d, 2 * d)
    w2, b2 = _linear_init(ks[5], 2 * d, d)
    return dict(wq=wq, bq=bq, wk=wk, bk=bk, wv=wv, bv=bv, wo=wo, bo=bo,
                w1=w1, b1=b1, w2=w2, b2=b2)


def prepare_encoder_params(p, d):
    """One-time pad-to-128 + bf16 cast of all weights; fuse q|k|v along N."""
    D_pad = _round_up(d, 128)
    H_pad = _round_up(2 * d, 128)

    def wpad(w, r, c):
        return _pad2d(w, r, c).astype(jnp.bfloat16)

    def bpad(b, c):
        return _pad2d(b.reshape(1, -1), 1, c).astype(jnp.float32)

    wqkv = jnp.concatenate([wpad(p["wq"], D_pad, D_pad),
                            wpad(p["wk"], D_pad, D_pad),
                            wpad(p["wv"], D_pad, D_pad)], axis=1)    # (D_pad, 3*D_pad)
    bqkv = jnp.concatenate([bpad(p["bq"], D_pad),
                            bpad(p["bk"], D_pad),
                            bpad(p["bv"], D_pad)], axis=1)           # (1, 3*D_pad)
    return dict(
        wqkv=wqkv, bqkv=bqkv,
        wo=wpad(p["wo"], D_pad, D_pad), bo=bpad(p["bo"], D_pad),
        w1=wpad(p["w1"], D_pad, H_pad), b1=bpad(p["b1"], H_pad),
        w2=wpad(p["w2"], H_pad, D_pad), b2=bpad(p["b2"], D_pad),
    )


# -----------------------------------------------------------------------------
# Pure-JAX reference (mirrors the kernels' bf16 operand/output casts; f32 accum).
# -----------------------------------------------------------------------------
def _bf16(a):
    return a.astype(jnp.bfloat16).astype(jnp.float32)


def _ln_ref(s):
    mean = s.mean(axis=(1, 2), keepdims=True)
    var = ((s - mean) ** 2).mean(axis=(1, 2), keepdims=True)
    return (s - mean) * jax.lax.rsqrt(var + 1e-5)


def encoder_ref(x, p):
    B, S, D = x.shape
    n_heads = max(1, D // 32)
    dh = D // n_heads
    scale = 1.0 / math.sqrt(D)

    x = x + positional_encoding(S, D)[None]
    q = _bf16(_bf16(x) @ _bf16(p["wq"]) + p["bq"])     # kernel emits bf16 q/k/v
    k = _bf16(_bf16(x) @ _bf16(p["wk"]) + p["bk"])
    v = _bf16(_bf16(x) @ _bf16(p["wv"]) + p["bv"])
    q4 = q.reshape(-1, B, S, dh)
    k4 = k.reshape(-1, B, S, dh)
    v4 = v.reshape(-1, B, S, dh)
    s = jnp.einsum("hbsd,hbtd->hbst", q4, k4) * scale
    attn = _bf16(jnp.einsum("hbst,hbtd->hbsd", _bf16(s), v4)).reshape(B, S, -1)
    attn_o = _bf16(attn) @ _bf16(p["wo"]) + p["bo"]
    h1 = _ln_ref(x + attn_o)
    hid = jnp.maximum(_bf16(h1) @ _bf16(p["w1"]) + p["b1"], 0.0)
    ff = _bf16(hid) @ _bf16(p["w2"]) + p["b2"]
    return _ln_ref(h1 + ff)


if __name__ == "__main__":
    key = jax.random.PRNGKey(0)
    B, S, D = 2, 8, 32            # input_dim=32 -> n_heads=1, FFN hidden=64

    kx, kp = jax.random.split(key)
    x = jax.random.normal(kx, (B, S, D), jnp.float32)
    params = init_encoder_params(kp, D)
    prepped = prepare_encoder_params(params, D)   # one-time pad + bf16 cast

    out = jax.jit(encoder_forward)(x, prepped)
    out = jax.block_until_ready(out)

    ref = encoder_ref(x, params)
    assert out.shape == (B, S, D)
    err = float(jnp.max(jnp.abs(out - ref)))
    # bf16 operands / bf16 intermediate activations -> widened tolerance.
    assert jnp.allclose(out, ref, atol=5e-2, rtol=5e-2), f"max abs err = {err}"

    print("KERNEL_OK")
</pallas_src>

<mosaic_0001>
module attributes {stable_mosaic.version = 11 : i64} {
  func.func @_linear_acc_kernel(%arg0: i32, %arg1: i32, %arg2: memref<8x128xbf16, #tpu.memory_space<vmem>>, %arg3: memref<128x384xbf16, #tpu.memory_space<vmem>>, %arg4: memref<1x384xf32, #tpu.memory_space<vmem>>, %arg5: memref<8x384xbf16, #tpu.memory_space<vmem>>, %arg6: memref<8x384xf32, #tpu.memory_space<vmem>>) attributes {dimension_semantics = [#tpu.dimension_semantics<parallel>, #tpu.dimension_semantics<arbitrary>], iteration_bounds = array<i64: 2, 1>, scalar_prefetch = 0 : i64, scratch_operands = 1 : i64, tpu.core_type = #tpu.core_type<tc>, window_params = [{transform_indices = @transform_0, window_bounds = array<i64: 8, 128>}, {transform_indices = @transform_1, window_bounds = array<i64: 128, 384>}, {pipeline_mode = #tpu.pipeline_mode<synchronous>, transform_indices = @transform_2, window_bounds = array<i64: 1, 384>}, {transform_indices = @transform_3, window_bounds = array<i64: 8, 384>}]} {
    %c0_i32 = arith.constant 0 : i32
    %0 = arith.cmpi eq, %arg1, %c0_i32 : i32
    %1 = arith.extui %0 : i1 to i32
    %c0_i32_0 = arith.constant 0 : i32
    %2 = arith.cmpi ne, %1, %c0_i32_0 : i32
    scf.if %2 {
      %cst_10 = arith.constant 0.000000e+00 : f32
      %12 = vector.broadcast %cst_10 : f32 to vector<8x384xf32>
      %c0_11 = arith.constant 0 : index
      %c0_12 = arith.constant 0 : index
      %13 = vector.load %arg6[%c0_11, %c0_12] : memref<8x384xf32, #tpu.memory_space<vmem>>, vector<8x384xf32>
      tpu.vector_store %arg6[%c0_11, %c0_12], %12 {strides = array<i32>} : memref<8x384xf32, #tpu.memory_space<vmem>>, vector<8x384xf32>,
    } else {
    }
    %c0 = arith.constant 0 : index
    %c0_1 = arith.constant 0 : index
    %3 = vector.load %arg6[%c0, %c0_1] : memref<8x384xf32, #tpu.memory_space<vmem>>, vector<8x384xf32>
    %c0_2 = arith.constant 0 : index
    %c0_3 = arith.constant 0 : index
    %4 = vector.load %arg2[%c0_2, %c0_3] : memref<8x128xbf16, #tpu.memory_space<vmem>>, vector<8x128xbf16>
    %c0_4 = arith.constant 0 : index
    %c0_5 = arith.constant 0 : index
    %5 = vector.load %arg3[%c0_4, %c0_5] : memref<128x384xbf16, #tpu.memory_space<vmem>>, vector<128x384xbf16>
    %cst = arith.constant dense<0.000000e+00> : vector<8x384xf32>
    %6 = tpu.matmul %4, %5, %cst {dimension_numbers = #tpu.dot_dimension_numbers<[1], [0], [0], [1], [0, 0, 1, 1], [], []>} : vector<8x128xbf16>, vector<128x384xbf16>, vector<8x384xf32> -> vector<8x384xf32>
    %7 = arith.addf %3, %6 : vector<8x384xf32>
    %c0_6 = arith.constant 0 : index
    %c0_7 = arith.constant 0 : index
    %8 = vector.load %arg6[%c0_6, %c0_7] : memref<8x384xf32, #tpu.memory_space<vmem>>, vector<8x384xf32>
    tpu.vector_store %arg6[%c0_6, %c0_7], %7 {strides = array<i32>} : memref<8x384xf32, #tpu.memory_space<vmem>>, vector<8x384xf32>,
    %c0_i32_8 = arith.constant 0 : i32
    %9 = arith.cmpi eq, %arg1, %c0_i32_8 : i32
    %10 = arith.extui %9 : i1 to i32
    %c0_i32_9 = arith.constant 0 : i32
    %11 = arith.cmpi ne, %10, %c0_i32_9 : i32
    scf.if %11 {
      %c0_10 = arith.constant 0 : index
      %c0_11 = arith.constant 0 : index
      %12 = vector.load %arg6[%c0_10, %c0_11] : memref<8x384xf32, #tpu.memory_space<vmem>>, vector<8x384xf32>
      %c0_12 = arith.constant 0 : index
      %c0_13 = arith.constant 0 : index
      %13 = vector.load %arg4[%c0_12, %c0_13] : memref<1x384xf32, #tpu.memory_space<vmem>>, vector<1x384xf32>
      %14 = vector.broadcast %13 : vector<1x384xf32> to vector<8x384xf32>
      %15 = arith.addf %12, %14 : vector<8x384xf32>
      %16 = arith.truncf %15 : vector<8x384xf32> to vector<8x384xbf16>
      %c0_14 = arith.constant 0 : index
      %c0_15 = arith.constant 0 : index
      %17 = vector.load %arg5[%c0_14, %c0_15] : memref<8x384xbf16, #tpu.memory_space<vmem>>, vector<8x384xbf16>
      tpu.vector_store %arg5[%c0_14, %c0_15], %16 {strides = array<i32>} : memref<8x384xbf16, #tpu.memory_space<vmem>>, vector<8x384xbf16>,
    } else {
    }
    return
  }
  func.func @transform_0(%arg0: i32, %arg1: i32) -> (i32, i32) {
    %c0_i32 = arith.constant 0 : i32
    return %arg0, %arg1 : i32, i32
  }
  func.func @transform_1(%arg0: i32, %arg1: i32) -> (i32, i32) {
    %c0_i32 = arith.constant 0 : i32
    %c0_i32_0 = arith.constant 0 : i32
    return %arg1, %c0_i32 : i32, i32
  }
  func.func @transform_2(%arg0: i32, %arg1: i32) -> (i32, i32) {
    %c0_i32 = arith.constant 0 : i32
    %c0_i32_0 = arith.constant 0 : i32
    %c0_i32_1 = arith.constant 0 : i32
    return %c0_i32, %c0_i32_0 : i32, i32
  }
  func.func @transform_3(%arg0: i32, %arg1: i32) -> (i32, i32) {
    %c0_i32 = arith.constant 0 : i32
    %c0_i32_0 = arith.constant 0 : i32
    return %arg0, %c0_i32 : i32, i32
  }
}

module attributes {stable_mosaic.version = 11 : i64} {
  func.func @_attn_core_kernel(%arg0: i32, %arg1: memref<1x8x32xbf16, #tpu.memory_space<vmem>>, %arg2: memref<1x8x32xbf16, #tpu.memory_space<vmem>>, %arg3: memref<1x8x32xbf16, #tpu.memory_space<vmem>>, %arg4: memref<1x8x32xbf16, #tpu.memory_space<vmem>>) attributes {dimension_semantics = [#tpu.dimension_semantics<parallel>], iteration_bounds = array<i64: 2>, scalar_prefetch = 0 : i64, scratch_operands = 0 : i64, tpu.core_type = #tpu.core_type<tc>, window_params = [{transform_indices = @transform_0, window_bounds = array<i64: 1, 8, 32>}, {transform_indices = @transform_1, window_bounds = array<i64: 1, 8, 32>}, {transform_indices = @transform_2, window_bounds = array<i64: 1, 8, 32>}, {transform_indices = @transform_3, window_bounds = array<i64: 1, 8, 32>}]} {
    %c0 = arith.constant 0 : index
    %c0_0 = arith.constant 0 : index
    %c0_1 = arith.constant 0 : index
    %0 = vector.load %arg1[%c0, %c0_0, %c0_1] : memref<1x8x32xbf16, #tpu.memory_space<vmem>>, vector<1x8x32xbf16>
    %c0_2 = arith.constant 0 : index
    %c0_3 = arith.constant 0 : index
    %c0_4 = arith.constant 0 : index
    %1 = vector.load %arg2[%c0_2, %c0_3, %c0_4] : memref<1x8x32xbf16, #tpu.memory_space<vmem>>, vector<1x8x32xbf16>
    "tpu.trace_start"() <{level = 10 : i32, message = "gsd,gtd->gst"}> : () -> ()
    %cst = arith.constant dense<0.000000e+00> : vector<1x8x8xf32>
    %2 = tpu.matmul %0, %1, %cst {dimension_numbers = #tpu.dot_dimension_numbers<[2], [2], [1], [1], [0, 0, 0, 1, 1, 1], [0], [0]>} : vector<1x8x32xbf16>, vector<1x8x32xbf16>, vector<1x8x8xf32> -> vector<1x8x8xf32>
    "tpu.trace_stop"() : () -> ()
    %cst_5 = arith.constant 0.176776692 : f32
    %3 = vector.broadcast %cst_5 : f32 to vector<1x8x8xf32>
    %4 = arith.mulf %2, %3 : vector<1x8x8xf32>
    %5 = arith.truncf %4 : vector<1x8x8xf32> to vector<1x8x8xbf16>
    %c0_6 = arith.constant 0 : index
    %c0_7 = arith.constant 0 : index
    %c0_8 = arith.constant 0 : index
    %6 = vector.load %arg3[%c0_6, %c0_7, %c0_8] : memref<1x8x32xbf16, #tpu.memory_space<vmem>>, vector<1x8x32xbf16>
    "tpu.trace_start"() <{level = 10 : i32, message = "gst,gtd->gsd"}> : () -> ()
    %cst_9 = arith.constant dense<0.000000e+00> : vector<1x8x32xf32>
    %7 = tpu.matmul %5, %6, %cst_9 {dimension_numbers = #tpu.dot_dimension_numbers<[2], [1], [1], [2], [0, 0, 0, 1, 1, 2], [0], [0]>} : vector<1x8x8xbf16>, vector<1x8x32xbf16>, vector<1x8x32xf32> -> vector<1x8x32xf32>
    "tpu.trace_stop"() : () -> ()
    %8 = arith.truncf %7 : vector<1x8x32xf32> to vector<1x8x32xbf16>
    %c0_10 = arith.constant 0 : index
    %c0_11 = arith.constant 0 : index
    %c0_12 = arith.constant 0 : index
    %9 = vector.load %arg4[%c0_10, %c0_11, %c0_12] : memref<1x8x32xbf16, #tpu.memory_space<vmem>>, vector<1x8x32xbf16>
    tpu.vector_store %arg4[%c0_10, %c0_11, %c0_12], %8 {strides = array<i32>} : memref<1x8x32xbf16, #tpu.memory_space<vmem>>, vector<1x8x32xbf16>,
    return
  }
  func.func @transform_0(%arg0: i32) -> (i32, i32, i32) {
    %c0_i32 = arith.constant 0 : i32
    %c0_i32_0 = arith.constant 0 : i32
    %c0_i32_1 = arith.constant 0 : i32
    return %arg0, %c0_i32, %c0_i32_0 : i32, i32, i32
  }
  func.func @transform_1(%arg0: i32) -> (i32, i32, i32) {
    %c0_i32 = arith.constant 0 : i32
    %c0_i32_0 = arith.constant 0 : i32
    %c0_i32_1 = arith.constant 0 : i32
    return %arg0, %c0_i32, %c0_i32_0 : i32, i32, i32
  }
  func.func @transform_2(%arg0: i32) -> (i32, i32, i32) {
    %c0_i32 = arith.constant 0 : i32
    %c0_i32_0 = arith.constant 0 : i32
    %c0_i32_1 = arith.constant 0 : i32
    return %arg0, %c0_i32, %c0_i32_0 : i32, i32, i32
  }
  func.func @transform_3(%arg0: i32) -> (i32, i32, i32) {
    %c0_i32 = arith.constant 0 : i32
    %c0_i32_0 = arith.constant 0 : i32
    %c0_i32_1 = arith.constant 0 : i32
    return %arg0, %c0_i32, %c0_i32_0 : i32, i32, i32
  }
}

module attributes {stable_mosaic.version = 11 : i64} {
  func.func @_linear_res_kernel(%arg0: i32, %arg1: i32, %arg2: memref<8x128xbf16, #tpu.memory_space<vmem>>, %arg3: memref<128x128xbf16, #tpu.memory_space<vmem>>, %arg4: memref<1x128xf32, #tpu.memory_space<vmem>>, %arg5: memref<8x128xf32, #tpu.memory_space<vmem>>, %arg6: memref<8x128xf32, #tpu.memory_space<vmem>>) attributes {dimension_semantics = [#tpu.dimension_semantics<parallel>, #tpu.dimension_semantics<arbitrary>], iteration_bounds = array<i64: 2, 1>, scalar_prefetch = 0 : i64, scratch_operands = 0 : i64, tpu.core_type = #tpu.core_type<tc>, window_params = [{transform_indices = @transform_0, window_bounds = array<i64: 8, 128>}, {transform_indices = @transform_1, window_bounds = array<i64: 128, 128>}, {pipeline_mode = #tpu.pipeline_mode<synchronous>, transform_indices = @transform_2, window_bounds = array<i64: 1, 128>}, {transform_indices = @transform_3, window_bounds = array<i64: 8, 128>}, {transform_indices = @transform_4, window_bounds = array<i64: 8, 128>}]} {
    %c0_i32 = arith.constant 0 : i32
    %0 = arith.cmpi eq, %arg1, %c0_i32 : i32
    %1 = arith.extui %0 : i1 to i32
    %c0_i32_0 = arith.constant 0 : i32
    %2 = arith.cmpi ne, %1, %c0_i32_0 : i32
    scf.if %2 {
      %cst_10 = arith.constant 0.000000e+00 : f32
      %12 = vector.broadcast %cst_10 : f32 to vector<8x128xf32>
      %c0_11 = arith.constant 0 : index
      %c0_12 = arith.constant 0 : index
      %13 = vector.load %arg6[%c0_11, %c0_12] : memref<8x128xf32, #tpu.memory_space<vmem>>, vector<8x128xf32>
      tpu.vector_store %arg6[%c0_11, %c0_12], %12 {strides = array<i32>} : memref<8x128xf32, #tpu.memory_space<vmem>>, vector<8x128xf32>,
    } else {
    }
    %c0 = arith.constant 0 : index
    %c0_1 = arith.constant 0 : index
    %3 = vector.load %arg6[%c0, %c0_1] : memref<8x128xf32, #tpu.memory_space<vmem>>, vector<8x128xf32>
    %c0_2 = arith.constant 0 : index
    %c0_3 = arith.constant 0 : index
    %4 = vector.load %arg2[%c0_2, %c0_3] : memref<8x128xbf16, #tpu.memory_space<vmem>>, vector<8x128xbf16>
    %c0_4 = arith.constant 0 : index
    %c0_5 = arith.constant 0 : index
    %5 = vector.load %arg3[%c0_4, %c0_5] : memref<128x128xbf16, #tpu.memory_space<vmem>>, vector<128x128xbf16>
    %cst = arith.constant dense<0.000000e+00> : vector<8x128xf32>
    %6 = tpu.matmul %4, %5, %cst {dimension_numbers = #tpu.dot_dimension_numbers<[1], [0], [0], [1], [0, 0, 1, 1], [], []>} : vector<8x128xbf16>, vector<128x128xbf16>, vector<8x128xf32> -> vector<8x128xf32>
    %7 = arith.addf %3, %6 : vector<8x128xf32>
    %c0_6 = arith.constant 0 : index
    %c0_7 = arith.constant 0 : index
    %8 = vector.load %arg6[%c0_6, %c0_7] : memref<8x128xf32, #tpu.memory_space<vmem>>, vector<8x128xf32>
    tpu.vector_store %arg6[%c0_6, %c0_7], %7 {strides = array<i32>} : memref<8x128xf32, #tpu.memory_space<vmem>>, vector<8x128xf32>,
    %c0_i32_8 = arith.constant 0 : i32
    %9 = arith.cmpi eq, %arg1, %c0_i32_8 : i32
    %10 = arith.extui %9 : i1 to i32
    %c0_i32_9 = arith.constant 0 : i32
    %11 = arith.cmpi ne, %10, %c0_i32_9 : i32
    scf.if %11 {
      %c0_10 = arith.constant 0 : index
      %c0_11 = arith.constant 0 : index
      %12 = vector.load %arg6[%c0_10, %c0_11] : memref<8x128xf32, #tpu.memory_space<vmem>>, vector<8x128xf32>
      %c0_12 = arith.constant 0 : index
      %c0_13 = arith.constant 0 : index
      %13 = vector.load %arg4[%c0_12, %c0_13] : memref<1x128xf32, #tpu.memory_space<vmem>>, vector<1x128xf32>
      %c0_14 = arith.constant 0 : index
      %c0_15 = arith.constant 0 : index
      %14 = vector.load %arg5[%c0_14, %c0_15] : memref<8x128xf32, #tpu.memory_space<vmem>>, vector<8x128xf32>
      %15 = vector.broadcast %13 : vector<1x128xf32> to vector<8x128xf32>
      %16 = arith.addf %15, %14 : vector<8x128xf32>
      %17 = arith.addf %12, %16 : vector<8x128xf32>
      %c0_16 = arith.constant 0 : index
      %c0_17 = arith.constant 0 : index
      %18 = vector.load %arg6[%c0_16, %c0_17] : memref<8x128xf32, #tpu.memory_space<vmem>>, vector<8x128xf32>
      tpu.vector_store %arg6[%c0_16, %c0_17], %17 {strides = array<i32>} : memref<8x128xf32, #tpu.memory_space<vmem>>, vector<8x128xf32>,
    } else {
    }
    return
  }
  func.func @transform_0(%arg0: i32, %arg1: i32) -> (i32, i32) {
    %c0_i32 = arith.constant 0 : i32
    return %arg0, %arg1 : i32, i32
  }
  func.func @transform_1(%arg0: i32, %arg1: i32) -> (i32, i32) {
    %c0_i32 = arith.constant 0 : i32
    %c0_i32_0 = arith.constant 0 : i32
    return %arg1, %c0_i32 : i32, i32
  }
  func.func @transform_2(%arg0: i32, %arg1: i32) -> (i32, i32) {
    %c0_i32 = arith.constant 0 : i32
    %c0_i32_0 = arith.constant 0 : i32
    %c0_i32_1 = arith.constant 0 : i32
    return %c0_i32, %c0_i32_0 : i32, i32
  }
  func.func @transform_3(%arg0: i32, %arg1: i32) -> (i32, i32) {
    %c0_i32 = arith.constant 0 : i32
    %c0_i32_0 = arith.constant 0 : i32
    return %arg0, %c0_i32 : i32, i32
  }
  func.func @transform_4(%arg0: i32, %arg1: i32) -> (i32, i32) {
    %c0_i32 = arith.constant 0 : i32
    %c0_i32_0 = arith.constant 0 : i32
    return %arg0, %c0_i32 : i32, i32
  }
}

module attributes {stable_mosaic.version = 11 : i64} {
  func.func @_ln_kernel(%arg0: i32, %arg1: memref<1x8x32xf32, #tpu.memory_space<vmem>>, %arg2: memref<1x8x32xf32, #tpu.memory_space<vmem>>) attributes {dimension_semantics = [#tpu.dimension_semantics<parallel>], iteration_bounds = array<i64: 2>, scalar_prefetch = 0 : i64, scratch_operands = 0 : i64, tpu.core_type = #tpu.core_type<tc>, window_params = [{transform_indices = @transform_0, window_bounds = array<i64: 1, 8, 32>}, {transform_indices = @transform_1, window_bounds = array<i64: 1, 8, 32>}]} {
    %c0 = arith.constant 0 : index
    %c0_0 = arith.constant 0 : index
    %c0_1 = arith.constant 0 : index
    %0 = vector.load %arg1[%c0, %c0_0, %c0_1] : memref<1x8x32xf32, #tpu.memory_space<vmem>>, vector<1x8x32xf32>
    %cst = arith.constant dense<0.000000e+00> : vector<1x8xf32>
    %1 = vector.multi_reduction <add>, %0, %cst [2] : vector<1x8x32xf32> to vector<1x8xf32>
    %2 = vector.shape_cast %1 : vector<1x8xf32> to vector<1x8x1xf32>
    %cst_2 = arith.constant dense<0.000000e+00> : vector<1x1xf32>
    %3 = vector.multi_reduction <add>, %2, %cst_2 [1] : vector<1x8x1xf32> to vector<1x1xf32>
    %4 = vector.shape_cast %3 : vector<1x1xf32> to vector<1x1x1xf32>
    %cst_3 = arith.constant 2.560000e+02 : f32
    %5 = vector.broadcast %cst_3 : f32 to vector<1x1x1xf32>
    %6 = arith.divf %4, %5 : vector<1x1x1xf32>
    %7 = vector.broadcast %6 : vector<1x1x1xf32> to vector<1x8x32xf32>
    %8 = arith.subf %0, %7 : vector<1x8x32xf32>
    %9 = arith.mulf %8, %8 : vector<1x8x32xf32>
    %cst_4 = arith.constant dense<0.000000e+00> : vector<1x8xf32>
    %10 = vector.multi_reduction <add>, %9, %cst_4 [2] : vector<1x8x32xf32> to vector<1x8xf32>
    %11 = vector.shape_cast %10 : vector<1x8xf32> to vector<1x8x1xf32>
    %cst_5 = arith.constant dense<0.000000e+00> : vector<1x1xf32>
    %12 = vector.multi_reduction <add>, %11, %cst_5 [1] : vector<1x8x1xf32> to vector<1x1xf32>
    %13 = vector.shape_cast %12 : vector<1x1xf32> to vector<1x1x1xf32>
    %cst_6 = arith.constant 2.560000e+02 : f32
    %14 = vector.broadcast %cst_6 : f32 to vector<1x1x1xf32>
    %15 = arith.divf %13, %14 : vector<1x1x1xf32>
    %cst_7 = arith.constant 9.99999974E-6 : f32
    %16 = vector.broadcast %cst_7 : f32 to vector<1x1x1xf32>
    %17 = arith.addf %15, %16 : vector<1x1x1xf32>
    %18 = math.rsqrt %17 : vector<1x1x1xf32>
    %19 = vector.broadcast %18 : vector<1x1x1xf32> to vector<1x8x32xf32>
    %20 = arith.mulf %8, %19 : vector<1x8x32xf32>
    %c0_8 = arith.constant 0 : index
    %c0_9 = arith.constant 0 : index
    %c0_10 = arith.constant 0 : index
    %21 = vector.load %arg2[%c0_8, %c0_9, %c0_10] : memref<1x8x32xf32, #tpu.memory_space<vmem>>, vector<1x8x32xf32>
    tpu.vector_store %arg2[%c0_8, %c0_9, %c0_10], %20 {strides = array<i32>} : memref<1x8x32xf32, #tpu.memory_space<vmem>>, vector<1x8x32xf32>,
    return
  }
  func.func @transform_0(%arg0: i32) -> (i32, i32, i32) {
    %c0_i32 = arith.constant 0 : i32
    %c0_i32_0 = arith.constant 0 : i32
    %c0_i32_1 = arith.constant 0 : i32
    return %arg0, %c0_i32, %c0_i32_0 : i32, i32, i32
  }
  func.func @transform_1(%arg0: i32) -> (i32, i32, i32) {
    %c0_i32 = arith.constant 0 : i32
    %c0_i32_0 = arith.constant 0 : i32
    %c0_i32_1 = arith.constant 0 : i32
    return %arg0, %c0_i32, %c0_i32_0 : i32, i32, i32
  }
}

module attributes {stable_mosaic.version = 11 : i64} {
  func.func @_ffn_kernel(%arg0: i32, %arg1: i32, %arg2: memref<8x128xf32, #tpu.memory_space<vmem>>, %arg3: memref<128x128xbf16, #tpu.memory_space<vmem>>, %arg4: memref<1x128xf32, #tpu.memory_space<vmem>>, %arg5: memref<128x128xbf16, #tpu.memory_space<vmem>>, %arg6: memref<1x128xf32, #tpu.memory_space<vmem>>, %arg7: memref<8x128xf32, #tpu.memory_space<vmem>>) attributes {dimension_semantics = [#tpu.dimension_semantics<parallel>, #tpu.dimension_semantics<arbitrary>], iteration_bounds = array<i64: 2, 1>, scalar_prefetch = 0 : i64, scratch_operands = 0 : i64, tpu.core_type = #tpu.core_type<tc>, window_params = [{transform_indices = @transform_0, window_bounds = array<i64: 8, 128>}, {transform_indices = @transform_1, window_bounds = array<i64: 128, 128>}, {transform_indices = @transform_2, window_bounds = array<i64: 1, 128>}, {transform_indices = @transform_3, window_bounds = array<i64: 128, 128>}, {pipeline_mode = #tpu.pipeline_mode<synchronous>, transform_indices = @transform_4, window_bounds = array<i64: 1, 128>}, {transform_indices = @transform_5, window_bounds = array<i64: 8, 128>}]} {
    %c0_i32 = arith.constant 0 : i32
    %0 = arith.cmpi eq, %arg1, %c0_i32 : i32
    %1 = arith.extui %0 : i1 to i32
    %c0_i32_0 = arith.constant 0 : i32
    %2 = arith.cmpi ne, %1, %c0_i32_0 : i32
    scf.if %2 {
      %cst_16 = arith.constant 0.000000e+00 : f32
      %21 = vector.broadcast %cst_16 : f32 to vector<8x128xf32>
      %c0_17 = arith.constant 0 : index
      %c0_18 = arith.constant 0 : index
      %22 = vector.load %arg7[%c0_17, %c0_18] : memref<8x128xf32, #tpu.memory_space<vmem>>, vector<8x128xf32>
      tpu.vector_store %arg7[%c0_17, %c0_18], %21 {strides = array<i32>} : memref<8x128xf32, #tpu.memory_space<vmem>>, vector<8x128xf32>,
    } else {
    }
    %c0 = arith.constant 0 : index
    %c0_1 = arith.constant 0 : index
    %3 = vector.load %arg2[%c0, %c0_1] : memref<8x128xf32, #tpu.memory_space<vmem>>, vector<8x128xf32>
    %4 = arith.truncf %3 : vector<8x128xf32> to vector<8x128xbf16>
    %c0_2 = arith.constant 0 : index
    %c0_3 = arith.constant 0 : index
    %5 = vector.load %arg3[%c0_2, %c0_3] : memref<128x128xbf16, #tpu.memory_space<vmem>>, vector<128x128xbf16>
    %cst = arith.constant dense<0.000000e+00> : vector<8x128xf32>
    %6 = tpu.matmul %4, %5, %cst {dimension_numbers = #tpu.dot_dimension_numbers<[1], [0], [0], [1], [0, 0, 1, 1], [], []>} : vector<8x128xbf16>, vector<128x128xbf16>, vector<8x128xf32> -> vector<8x128xf32>
    %c0_4 = arith.constant 0 : index
    %c0_5 = arith.constant 0 : index
    %7 = vector.load %arg4[%c0_4, %c0_5] : memref<1x128xf32, #tpu.memory_space<vmem>>, vector<1x128xf32>
    %8 = vector.broadcast %7 : vector<1x128xf32> to vector<8x128xf32>
    %9 = arith.addf %6, %8 : vector<8x128xf32>
    %cst_6 = arith.constant 0.000000e+00 : f32
    %10 = vector.broadcast %cst_6 : f32 to vector<8x128xf32>
    %11 = arith.maximumf %9, %10 : vector<8x128xf32>
    %c0_7 = arith.constant 0 : index
    %c0_8 = arith.constant 0 : index
    %12 = vector.load %arg7[%c0_7, %c0_8] : memref<8x128xf32, #tpu.memory_space<vmem>>, vector<8x128xf32>
    %13 = arith.truncf %11 : vector<8x128xf32> to vector<8x128xbf16>
    %c0_9 = arith.constant 0 : index
    %c0_10 = arith.constant 0 : index
    %14 = vector.load %arg5[%c0_9, %c0_10] : memref<128x128xbf16, #tpu.memory_space<vmem>>, vector<128x128xbf16>
    %cst_11 = arith.constant dense<0.000000e+00> : vector<8x128xf32>
    %15 = tpu.matmul %13, %14, %cst_11 {dimension_numbers = #tpu.dot_dimension_numbers<[1], [0], [0], [1], [0, 0, 1, 1], [], []>} : vector<8x128xbf16>, vector<128x128xbf16>, vector<8x128xf32> -> vector<8x128xf32>
    %16 = arith.addf %12, %15 : vector<8x128xf32>
    %c0_12 = arith.constant 0 : index
    %c0_13 = arith.constant 0 : index
    %17 = vector.load %arg7[%c0_12, %c0_13] : memref<8x128xf32, #tpu.memory_space<vmem>>, vector<8x128xf32>
    tpu.vector_store %arg7[%c0_12, %c0_13], %16 {strides = array<i32>} : memref<8x128xf32, #tpu.memory_space<vmem>>, vector<8x128xf32>,
    %c0_i32_14 = arith.constant 0 : i32
    %18 = arith.cmpi eq, %arg1, %c0_i32_14 : i32
    %19 = arith.extui %18 : i1 to i32
    %c0_i32_15 = arith.constant 0 : i32
    %20 = arith.cmpi ne, %19, %c0_i32_15 : i32
    scf.if %20 {
      %c0_16 = arith.constant 0 : index
      %c0_17 = arith.constant 0 : index
      %21 = vector.load %arg7[%c0_16, %c0_17] : memref<8x128xf32, #tpu.memory_space<vmem>>, vector<8x128xf32>
      %c0_18 = arith.constant 0 : index
      %c0_19 = arith.constant 0 : index
      %22 = vector.load %arg6[%c0_18, %c0_19] : memref<1x128xf32, #tpu.memory_space<vmem>>, vector<1x128xf32>
      %c0_20 = arith.constant 0 : index
      %c0_21 = arith.constant 0 : index
      %23 = vector.load %arg2[%c0_20, %c0_21] : memref<8x128xf32, #tpu.memory_space<vmem>>, vector<8x128xf32>
      %24 = vector.broadcast %22 : vector<1x128xf32> to vector<8x128xf32>
      %25 = arith.addf %24, %23 : vector<8x128xf32>
      %26 = arith.addf %21, %25 : vector<8x128xf32>
      %c0_22 = arith.constant 0 : index
      %c0_23 = arith.constant 0 : index
      %27 = vector.load %arg7[%c0_22, %c0_23] : memref<8x128xf32, #tpu.memory_space<vmem>>, vector<8x128xf32>
      tpu.vector_store %arg7[%c0_22, %c0_23], %26 {strides = array<i32>} : memref<8x128xf32, #tpu.memory_space<vmem>>, vector<8x128xf32>,
    } else {
    }
    return
  }
  func.func @transform_0(%arg0: i32, %arg1: i32) -> (i32, i32) {
    %c0_i32 = arith.constant 0 : i32
    %c0_i32_0 = arith.constant 0 : i32
    return %arg0, %c0_i32 : i32, i32
  }
  func.func @transform_1(%arg0: i32, %arg1: i32) -> (i32, i32) {
    %c0_i32 = arith.constant 0 : i32
    %c0_i32_0 = arith.constant 0 : i32
    return %c0_i32, %arg1 : i32, i32
  }
  func.func @transform_2(%arg0: i32, %arg1: i32) -> (i32, i32) {
    %c0_i32 = arith.constant 0 : i32
    %c0_i32_0 = arith.constant 0 : i32
    return %c0_i32, %arg1 : i32, i32
  }
  func.func @transform_3(%arg0: i32, %arg1: i32) -> (i32, i32) {
    %c0_i32 = arith.constant 0 : i32
    %c0_i32_0 = arith.constant 0 : i32
    return %arg1, %c0_i32 : i32, i32
  }
  func.func @transform_4(%arg0: i32, %arg1: i32) -> (i32, i32) {
    %c0_i32 = arith.constant 0 : i32
    %c0_i32_0 = arith.constant 0 : i32
    %c0_i32_1 = arith.constant 0 : i32
    return %c0_i32, %c0_i32_0 : i32, i32
  }
  func.func @transform_5(%arg0: i32, %arg1: i32) -> (i32, i32) {
    %c0_i32 = arith.constant 0 : i32
    %c0_i32_0 = arith.constant 0 : i32
    return %arg0, %c0_i32 : i32, i32
  }
}

module attributes {stable_mosaic.version = 11 : i64} {
  func.func @_ln_kernel(%arg0: i32, %arg1: memref<1x8x32xf32, #tpu.memory_space<vmem>>, %arg2: memref<1x8x32xf32, #tpu.memory_space<vmem>>) attributes {dimension_semantics = [#tpu.dimension_semantics<parallel>], iteration_bounds = array<i64: 2>, scalar_prefetch = 0 : i64, scratch_operands = 0 : i64, tpu.core_type = #tpu.core_type<tc>, window_params = [{transform_indices = @transform_0, window_bounds = array<i64: 1, 8, 32>}, {transform_indices = @transform_1, window_bounds = array<i64: 1, 8, 32>}]} {
    %c0 = arith.constant 0 : index
    %c0_0 = arith.constant 0 : index
    %c0_1 = arith.constant 0 : index
    %0 = vector.load %arg1[%c0, %c0_0, %c0_1] : memref<1x8x32xf32, #tpu.memory_space<vmem>>, vector<1x8x32xf32>
    %cst = arith.constant dense<0.000000e+00> : vector<1x8xf32>
    %1 = vector.multi_reduction <add>, %0, %cst [2] : vector<1x8x32xf32> to vector<1x8xf32>
    %2 = vector.shape_cast %1 : vector<1x8xf32> to vector<1x8x1xf32>
    %cst_2 = arith.constant dense<0.000000e+00> : vector<1x1xf32>
    %3 = vector.multi_reduction <add>, %2, %cst_2 [1] : vector<1x8x1xf32> to vector<1x1xf32>
    %4 = vector.shape_cast %3 : vector<1x1xf32> to vector<1x1x1xf32>
    %cst_3 = arith.constant 2.560000e+02 : f32
    %5 = vector.broadcast %cst_3 : f32 to vector<1x1x1xf32>
    %6 = arith.divf %4, %5 : vector<1x1x1xf32>
    %7 = vector.broadcast %6 : vector<1x1x1xf32> to vector<1x8x32xf32>
    %8 = arith.subf %0, %7 : vector<1x8x32xf32>
    %9 = arith.mulf %8, %8 : vector<1x8x32xf32>
    %cst_4 = arith.constant dense<0.000000e+00> : vector<1x8xf32>
    %10 = vector.multi_reduction <add>, %9, %cst_4 [2] : vector<1x8x32xf32> to vector<1x8xf32>
    %11 = vector.shape_cast %10 : vector<1x8xf32> to vector<1x8x1xf32>
    %cst_5 = arith.constant dense<0.000000e+00> : vector<1x1xf32>
    %12 = vector.multi_reduction <add>, %11, %cst_5 [1] : vector<1x8x1xf32> to vector<1x1xf32>
    %13 = vector.shape_cast %12 : vector<1x1xf32> to vector<1x1x1xf32>
    %cst_6 = arith.constant 2.560000e+02 : f32
    %14 = vector.broadcast %cst_6 : f32 to vector<1x1x1xf32>
    %15 = arith.divf %13, %14 : vector<1x1x1xf32>
    %cst_7 = arith.constant 9.99999974E-6 : f32
    %16 = vector.broadcast %cst_7 : f32 to vector<1x1x1xf32>
    %17 = arith.addf %15, %16 : vector<1x1x1xf32>
    %18 = math.rsqrt %17 : vector<1x1x1xf32>
    %19 = vector.broadcast %18 : vector<1x1x1xf32> to vector<1x8x32xf32>
    %20 = arith.mulf %8, %19 : vector<1x8x32xf32>
    %c0_8 = arith.constant 0 : index
    %c0_9 = arith.constant 0 : index
    %c0_10 = arith.constant 0 : index
    %21 = vector.load %arg2[%c0_8, %c0_9, %c0_10] : memref<1x8x32xf32, #tpu.memory_space<vmem>>, vector<1x8x32xf32>
    tpu.vector_store %arg2[%c0_8, %c0_9, %c0_10], %20 {strides = array<i32>} : memref<1x8x32xf32, #tpu.memory_space<vmem>>, vector<1x8x32xf32>,
    return
  }
  func.func @transform_0(%arg0: i32) -> (i32, i32, i32) {
    %c0_i32 = arith.constant 0 : i32
    %c0_i32_0 = arith.constant 0 : i32
    %c0_i32_1 = arith.constant 0 : i32
    return %arg0, %c0_i32, %c0_i32_0 : i32, i32, i32
  }
  func.func @transform_1(%arg0: i32) -> (i32, i32, i32) {
    %c0_i32 = arith.constant 0 : i32
    %c0_i32_0 = arith.constant 0 : i32
    %c0_i32_1 = arith.constant 0 : i32
    return %arg0, %c0_i32, %c0_i32_0 : i32, i32, i32
  }
}

</mosaic_0001>

<llo_original>
// kernel: encoder_forward.6
$region0: #{encoder_forward.6}
  #allocation0 [shape = 'u32[]', space=smem, size = 0x4, offset = 0x4, fixed_abs, tag = 'smem constant byte address 0x4 - core index']
  #allocation1 [shape = 'u32[144,128]{1,0:T(1,128)}', space=vmem, size = 0x12000, scoped, tag = 'internal scratch']
  #allocation2 [shape = 'f32[8,384]{1,0:T(8,128)}', space=vmem, size = 0x3000, scoped, tag = 'scratch operand']
  %s0 = inlined_call_operand.vmem [shape: bf16[16,128], index: 0, kind: input, shape index: {}]
  %s1 = inlined_call_operand.hbm [shape: bf16[128,384], index: 1, kind: input, shape index: {}]
  %s2 = inlined_call_operand.vmem [shape: f32[1,384], index: 2, kind: input, shape index: {}]
  %s3 = inlined_call_operand.vmem [shape: bf16[16,384], index: 3, kind: output, shape index: {}]
  %s4 = sld [smem:[#allocation0]]
  $region57: #{encoder_forward.6} parent=0
    _
  %s6 = ssub.s32 1, %s4
  %s7 = scalar_select 0, %s6, %s4
  $region1: #{encoder_forward.6} parent=0
    #allocation3 [shape = 'u8[98304]{0}', space=vmem, size = 0x18000, scoped, tag = 'input window, operand 1, single buffered']
    #allocation4 [shape = 's32[2]{0}', space=sflag, size = 0x8, scoped, tag = 'scoped memory for encoder_forward.6']
    %8 = vsyncpa [#allocation4], 0
    loop: start=0, step=1, limit=4
    $region2: #{encoder_forward.6} parent=1 // loop_pre_header
      _
    $region3: #{encoder_forward.6} parent=1 // loop_header
      %s10 = sphi 0, %s14
      %p11 = scmp.ge.s32.totalorder %s10, 4
      %s17 = sphi 0, %s29
      %s18 = sphi 0, %s25
      %s19 = sphi 0, %s17
      %s20 = sphi 0, %s18
      %s21 = sphi 0, %s19
      %s22 = sphi 0, %s20
      %s34 = sphi 0, %s36
      %s37 = sphi 0, %s34
      %s38 = sphi 0, %s37
      %s54 = sphi 0, %s38
      %s60 = sphi 0, %s62
      %s63 = sphi 0, %s60
      %s64 = sphi 0, %s63
      %s80 = sphi 0, %s64
      %s84 = sphi 0, %s84
      %s86 = sphi 0, %s84
      %s87 = sphi 0, %s86
      %s101 = sphi 0, %s87
      %s107 = sphi 0, %s109
      %s110 = sphi 0, %s107
      %s111 = sphi 0, %s110
      %s127 = sphi 0, %s111
    $region4: #{encoder_forward.6} parent=1 // loop_header_branch
      %13 = sbr.rel (%p11) target = $region8
    $region5: #{encoder_forward.6} parent=1 // loop_body
      %s15 = ssub.s32 %s10, 1
      %s16 = ssub.s32 %s10, 2
      %s23 = sadd.s32 1, %s18
      %p24 = scmp.ge.s32.totalorder %s23, 1
      %s25 = scalar_select %p24, 0, %s23
      %s26 = sadd.s32 1, %s17
      %s27 = scalar_select %p24, %s26, %s17
      %p28 = scmp.ge.s32.totalorder %s27, 2
      %s29 = scalar_select %p28, 0, %s27
      %s30 = ssub.s32 %s17, %s29
      %s31 = ssub.s32 %s18, %s25
      %s32 = sor.u32 %s30, %s31
      %p33 = scmp.eq.s32.totalorder %s32, 0
      %s35 = sadd.s32 %s34, 1
      %s36 = scalar_select %p33, %s34, %s35
      %p39 = pneg %p33
      %p40 = scmp.eq.s32.totalorder %s10, 1
      %p41 = por %p39, %p40
      %p42 = scmp.ne.s32.totalorder %s34, %s37
      %p43 = scmp.eq.s32.totalorder %s10, 0
      %p44 = por %p42, %p43
      %p45 = scmp.ne.s32.totalorder %s34, %s37
      %p46 = scmp.eq.s32.totalorder %s15, 1
      %p47 = por %p45, %p46
      %p48 = scmp.ne.s32.totalorder %s37, %s38
      %p49 = scmp.eq.s32.totalorder %s15, 0
      %p50 = por %p48, %p49
      %p51 = scmp.ne.s32.totalorder %s37, %s38
      %p52 = scmp.eq.s32.totalorder %s16, 1
      %p53 = por %p51, %p52
      %p55 = scmp.ne.s32.totalorder %s38, %s54
      %p56 = scmp.eq.s32.totalorder %s16, 0
      %p57 = por %p55, %p56
      %s58 = ssub.s32 %s18, %s25
      %p59 = scmp.eq.s32.totalorder %s58, 0
      %s61 = sadd.s32 %s60, 1
      %s62 = scalar_select %p59, %s60, %s61
      %p65 = pneg %p59
      %p66 = scmp.eq.s32.totalorder %s10, 1
      %p67 = por %p65, %p66
      %p68 = scmp.ne.s32.totalorder %s60, %s63
      %p69 = scmp.eq.s32.totalorder %s10, 0
      %p70 = por %p68, %p69
      %p71 = scmp.ne.s32.totalorder %s60, %s63
      %p72 = scmp.eq.s32.totalorder %s15, 1
      %p73 = por %p71, %p72
      %p74 = scmp.ne.s32.totalorder %s63, %s64
      %p75 = scmp.eq.s32.totalorder %s15, 0
      %p76 = por %p74, %p75
      %p77 = scmp.ne.s32.totalorder %s63, %s64
      %p78 = scmp.eq.s32.totalorder %s16, 1
      %p79 = por %p77, %p78
      %p81 = scmp.ne.s32.totalorder %s64, %s80
      %p82 = scmp.eq.s32.totalorder %s16, 0
      %p83 = por %p81, %p82
      %s85 = sadd.s32 %s84, 1
      %p88 = scmp.eq.s32.totalorder %s10, 1
      %p89 = scmp.ne.s32.totalorder %s84, %s86
      %p90 = scmp.eq.s32.totalorder %s10, 0
      %p91 = por %p89, %p90
      %p92 = scmp.ne.s32.totalorder %s84, %s86
      %p93 = scmp.eq.s32.totalorder %s15, 1
      %p94 = por %p92, %p93
      %p95 = scmp.ne.s32.totalorder %s86, %s87
      %p96 = scmp.eq.s32.totalorder %s15, 0
      %p97 = por %p95, %p96
      %p98 = scmp.ne.s32.totalorder %s86, %s87
      %p99 = scmp.eq.s32.totalorder %s16, 1
      %p100 = por %p98, %p99
      %p102 = scmp.ne.s32.totalorder %s87, %s101
      %p103 = scmp.eq.s32.totalorder %s16, 0
      %p104 = por %p102, %p103
      %s105 = ssub.s32 %s17, %s29
      %p106 = scmp.eq.s32.totalorder %s105, 0
      %s108 = sadd.s32 %s107, 1
      %s109 = scalar_select %p106, %s107, %s108
      %p112 = pneg %p106
      %p113 = scmp.eq.s32.totalorder %s10, 1
      %p114 = por %p112, %p113
      %p115 = scmp.ne.s32.totalorder %s107, %s110
      %p116 = scmp.eq.s32.totalorder %s10, 0
      %p117 = por %p115, %p116
      %p118 = scmp.ne.s32.totalorder %s107, %s110
      %p119 = scmp.eq.s32.totalorder %s15, 1
      %p120 = por %p118, %p119
      %p121 = scmp.ne.s32.totalorder %s110, %s111
      %p122 = scmp.eq.s32.totalorder %s15, 0
      %p123 = por %p121, %p122
      %p124 = scmp.ne.s32.totalorder %s110, %s111
      %p125 = scmp.eq.s32.totalorder %s16, 1
      %p126 = por %p124, %p125
      %p128 = scmp.ne.s32.totalorder %s111, %s127
      %p129 = scmp.eq.s32.totalorder %s16, 0
      %p130 = por %p128, %p129
      %p131 = scmp.le.s32.totalorder 1, %s10
      %p132 = scmp.lt.s32.totalorder %s10, 3
      %p133 = pnand %p131, %p132
      %p134 = pneg %p133
      // Predicated region
      $region9: #{encoder_forward.6} parent=5 // pred_check
        _
      $region10: #{encoder_forward.6} parent=5 // pred_check_branch
        %136 = sbr.rel (%p133) target = $region12
      $region11: #{encoder_forward.6} parent=5 // pred_region
        %s137 = ssub.s32 %s10, 1
        // Predicated region
        $region13: #{encoder_forward.6} parent=11 // pred_check
          %p138 = pneg %p76
        $region14: #{encoder_forward.6} parent=11 // pred_check_branch
          %140 = sbr.rel (%p138) target = $region16
        $region15: #{encoder_forward.6} parent=11 // pred_region
          %s141 = smul.u32 16, %s20
          %s143 = ssub.s32 3072, 3072
          %144 = vsyncadd [#allocation4], %s143
          %s145 = smul.addr %s141, 3
          %s146 = smul.addr %s145, 64
          %s147 = scalar_lea.hbm %s1, %s146
          %s148 = sshll.u32 [#allocation3], 4
          %s149 = int_to_ptr.vmem [resolvable:$true] %s148
          %154 = dma.hbm_to_vmem [thread:$0]  %s147, 3072, %s149, [#allocation4], 192, 192, 12
        $region16: #{encoder_forward.6} parent=11 // pred_fallthru
          _
        // Predicated region
        $region17: #{encoder_forward.6} parent=11 // pred_check
          %p155 = pneg %p97
        $region18: #{encoder_forward.6} parent=11 // pred_check_branch
          %157 = sbr.rel (%p155) target = $region20
        $region19: #{encoder_forward.6} parent=11 // pred_region
          _
        $region20: #{encoder_forward.6} parent=11 // pred_fallthru
          _
      $region12: #{encoder_forward.6} parent=5 // pred_fallthru
        _
      %p158 = scmp.lt.s32.totalorder %s10, 2
      // Predicated region
      $region21: #{encoder_forward.6} parent=5 // pred_check
        %p159 = pneg %p158
      $region22: #{encoder_forward.6} parent=5 // pred_check_branch
        %161 = sbr.rel (%p159) target = $region24
      $region23: #{encoder_forward.6} parent=5 // pred_region
        // Predicated region
        $region25: #{encoder_forward.6} parent=23 // pred_check
          %p162 = pneg %p44
        $region26: #{encoder_forward.6} parent=23 // pred_check_branch
          %164 = sbr.rel (%p162) target = $region28
        $region27: #{encoder_forward.6} parent=23 // pred_region
          %p165 = scmp.lt.s32.totalorder %s17, 1
          %s166 = scalar_select %p165, %s17, 1
          %p167 = scmp.lt.s32.totalorder %s18, 0
          %s168 = scalar_select %p167, %s18, 0
          %s169 = sadd.s32 %s168, %s166
          %s170 = smul.addr %s169, 4
          %s171 = scalar_lea.vmem %s0, %s170
        $region28: #{encoder_forward.6} parent=23 // pred_fallthru
          _
      $region24: #{encoder_forward.6} parent=5 // pred_fallthru
        _
      %p172 = scmp.le.s32.totalorder 1, %s10
      %p173 = scmp.lt.s32.totalorder %s10, 3
      %p174 = pnand %p172, %p173
      %p175 = pneg %p174
      // Predicated region
      $region29: #{encoder_forward.6} parent=5 // pred_check
        _
      $region30: #{encoder_forward.6} parent=5 // pred_check_branch
        %177 = sbr.rel (%p174) target = $region32
      $region31: #{encoder_forward.6} parent=5 // pred_region
        %s178 = ssub.s32 %s10, 1
        // Predicated region
        $region33: #{encoder_forward.6} parent=31 // pred_check
          %p179 = pneg %p76
        $region34: #{encoder_forward.6} parent=31 // pred_check_branch
          %181 = sbr.rel (%p179) target = $region36
        $region35: #{encoder_forward.6} parent=31 // pred_region
          %182 = dma.done [#allocation4], 3072
        $region36: #{encoder_forward.6} parent=31 // pred_fallthru
          _
        %p183 = scmp.lt.s32.totalorder %s19, 1
        %s184 = scalar_select %p183, %s19, 1
        %p185 = scmp.lt.s32.totalorder %s20, 0
        %s186 = scalar_select %p185, %s20, 0
        %s187 = sadd.s32 %s186, %s184
        %s188 = smul.addr %s187, 4
        %s189 = scalar_lea.vmem %s0, %s188
        %p190 = pneg %p50
        %p191 = pneg %p47
        %p192 = pneg %p76
        %p193 = pneg %p73
        %p194 = pneg %p97
        %p195 = pneg %p94
        %p196 = pneg %p123
        %p197 = pneg %p120
        %p198 = scmp.lt.s32.totalorder %s19, 1
        %s199 = scalar_select %p198, %s19, 1
        %s200 = smul.addr %s199, 3
        %s201 = smul.addr %s200, 4
        %s202 = scalar_lea.vmem %s3, %s201
        %p203 = scmp.lt.s32.totalorder %s19, 1
        %s204 = scalar_select %p203, %s19, 1
        %p205 = scmp.lt.s32.totalorder %s20, 0
        %s206 = scalar_select %p205, %s20, 0
        %s207 = sadd.s32 %s206, %s204
        %s208 = smul.addr %s207, 4
        %s209 = scalar_lea.vmem %s0, %s208
        %s210 = smul.u32 16, %s20
        %p211 = scmp.lt.s32.totalorder %s19, 1
        %s212 = scalar_select %p211, %s19, 1
        %s213 = smul.addr %s212, 3
        %s214 = smul.addr %s213, 4
        %s215 = scalar_lea.vmem %s3, %s214
        %p217 = scmp.eq.s32.totalorder %s20, 0
        // Predicated region
        $region37: #{encoder_forward.6} parent=31 // pred_check
          %p218 = pneg %p217
        $region38: #{encoder_forward.6} parent=31 // pred_check_branch
          %220 = sbr.rel (%p218) target = $region40
        $region39: #{encoder_forward.6} parent=31 // pred_region
          %221 = vst [vmem:[#allocation2] sm:$0xff] 0.0
          %222 = vst [vmem:[#allocation2 + $0x8] sm:$0xff] 0.0
          %223 = vst [vmem:[#allocation2 + $0x10] sm:$0xff] 0.0
        $region40: #{encoder_forward.6} parent=31 // pred_fallthru
          _
        %v224 = vld [vmem:[#allocation2] sm:$0xff]
        %v225 = vld [vmem:[#allocation2 + $0x8] sm:$0xff]
        %v226 = vld [vmem:[#allocation2 + $0x10] sm:$0xff]
        %v227 = vld [vmem:[%s209] sm:$0xf]
        %v228 = vld [vmem:[#allocation3] sm:$0xff]
        %v229 = vld [vmem:[#allocation3 + $0x8] sm:$0xf]
        %v230 = vld [vmem:[#allocation3 + $0xc] sm:$0xff]
        %v231 = vld [vmem:[#allocation3 + $0x14] sm:$0xf]
        %v232 = vld [vmem:[#allocation3 + $0x18] sm:$0xff]
        %v233 = vld [vmem:[#allocation3 + $0x20] sm:$0xf]
        %v234 = vld [vmem:[#allocation3 + $0x24] sm:$0xff]
        %v235 = vld [vmem:[#allocation3 + $0x2c] sm:$0xf]
        %v236 = vld [vmem:[#allocation3 + $0x30] sm:$0xff]
        %v237 = vld [vmem:[#allocation3 + $0x38] sm:$0xf]
        %v238 = vld [vmem:[#allocation3 + $0x3c] sm:$0xff]
        %v239 = vld [vmem:[#allocation3 + $0x44] sm:$0xf]
        %v240 = vld [vmem:[#allocation3 + $0x48] sm:$0xff]
        %v241 = vld [vmem:[#allocation3 + $0x50] sm:$0xf]
        %v242 = vld [vmem:[#allocation3 + $0x54] sm:$0xff]
        %v243 = vld [vmem:[#allocation3 + $0x5c] sm:$0xf]
        %v244 = vld [vmem:[#allocation3 + $0x60] sm:$0xff]
        %v245 = vld [vmem:[#allocation3 + $0x68] sm:$0xf]
        %v246 = vld [vmem:[#allocation3 + $0x6c] sm:$0xff]
        %v247 = vld [vmem:[#allocation3 + $0x74] sm:$0xf]
        %v248 = vld [vmem:[#allocation3 + $0x78] sm:$0xff]
        %v249 = vld [vmem:[#allocation3 + $0x80] sm:$0xf]
        %v250 = vld [vmem:[#allocation3 + $0x84] sm:$0xff]
        %v251 = vld [vmem:[#allocation3 + $0x8c] sm:$0xf]
        %v252 = vld [vmem:[#allocation3 + $0x90] sm:$0xff]
        %v253 = vld [vmem:[#allocation3 + $0x98] sm:$0xf]
        %v254 = vld [vmem:[#allocation3 + $0x9c] sm:$0xff]
        %v255 = vld [vmem:[#allocation3 + $0xa4] sm:$0xf]
        %v256 = vld [vmem:[#allocation3 + $0xa8] sm:$0xff]
        %v257 = vld [vmem:[#allocation3 + $0xb0] sm:$0xf]
        %v258 = vld [vmem:[#allocation3 + $0xb4] sm:$0xff]
        %v259 = vld [vmem:[#allocation3 + $0xbc] sm:$0xf]
        %v292 = vunpack.c.l.b16 %v228
        %v293 = vunpack.c.h.b16 %v228
        %v294 = vunpack.c.l.b16 %v229
        %v295 = vunpack.c.l.b16 %v230
        %v296 = vunpack.c.h.b16 %v230
        %v297 = vunpack.c.l.b16 %v231
        %v298 = vunpack.c.l.b16 %v232
        %v299 = vunpack.c.h.b16 %v232
        %v300 = vunpack.c.l.b16 %v233
        %v301 = vunpack.c.l.b16 %v234
        %v302 = vunpack.c.h.b16 %v234
        %v303 = vunpack.c.l.b16 %v235
        %v304 = vunpack.c.l.b16 %v236
        %v305 = vunpack.c.h.b16 %v236
        %v306 = vunpack.c.l.b16 %v237
        %v307 = vunpack.c.l.b16 %v238
        %v308 = vunpack.c.h.b16 %v238
        %v309 = vunpack.c.l.b16 %v239
        %v310 = vunpack.c.l.b16 %v240
        %v311 = vunpack.c.h.b16 %v240
        %v312 = vunpack.c.l.b16 %v241
        %v313 = vunpack.c.l.b16 %v242
        %v314 = vunpack.c.h.b16 %v242
        %v315 = vunpack.c.l.b16 %v243
        %v316 = vunpack.c.l.b16 %v244
        %v317 = vunpack.c.h.b16 %v244
        %v318 = vunpack.c.l.b16 %v245
        %v319 = vunpack.c.l.b16 %v246
        %v320 = vunpack.c.h.b16 %v246
        %v321 = vunpack.c.l.b16 %v247
        %v322 = vunpack.c.l.b16 %v248
        %v323 = vunpack.c.h.b16 %v248
        %v324 = vunpack.c.l.b16 %v249
        %v325 = vunpack.c.l.b16 %v250
        %v326 = vunpack.c.h.b16 %v250
        %v327 = vunpack.c.l.b16 %v251
        %v328 = vunpack.c.l.b16 %v252
        %v329 = vunpack.c.h.b16 %v252
        %v330 = vunpack.c.l.b16 %v253
        %v331 = vunpack.c.l.b16 %v254
        %v332 = vunpack.c.h.b16 %v254
        %v333 = vunpack.c.l.b16 %v255
        %v334 = vunpack.c.l.b16 %v256
        %v335 = vunpack.c.h.b16 %v256
        %v336 = vunpack.c.l.b16 %v257
        %v337 = vunpack.c.l.b16 %v258
        %v338 = vunpack.c.h.b16 %v258
        %v339 = vunpack.c.l.b16 %v259
        %v340 = vpack.c.b16 %v295, %v292
        %v341 = vpack.c.b16 %v296, %v293
        %v342 = vpack.c.b16 %v297, %v294
        %v343 = vpack.c.b16 %v301, %v298
        %v344 = vpack.c.b16 %v302, %v299
        %v345 = vpack.c.b16 %v303, %v300
        %v346 = vpack.c.b16 %v307, %v304
        %v347 = vpack.c.b16 %v308, %v305
        %v348 = vpack.c.b16 %v309, %v306
        %v349 = vpack.c.b16 %v313, %v310
        %v350 = vpack.c.b16 %v314, %v311
        %v351 = vpack.c.b16 %v315, %v312
        %v352 = vpack.c.b16 %v319, %v316
        %v353 = vpack.c.b16 %v320, %v317
        %v354 = vpack.c.b16 %v321, %v318
        %v355 = vpack.c.b16 %v325, %v322
        %v356 = vpack.c.b16 %v326, %v323
        %v357 = vpack.c.b16 %v327, %v324
        %v358 = vpack.c.b16 %v331, %v328
        %v359 = vpack.c.b16 %v332, %v329
        %v360 = vpack.c.b16 %v333, %v330
        %v361 = vpack.c.b16 %v337, %v334
        %v362 = vpack.c.b16 %v338, %v335
        %v363 = vpack.c.b16 %v339, %v336
        %388 = vmatprep.subr.bf16.mxu0 %v341
        %389 = vmatpush1.bf16.msra.mxu0 %v340
        %390 = vmatprep.subr.bf16.mxu0 %v344
        %391 = vmatpush1.bf16.msra.mxu0 %v343
        %392 = vmatprep.subr.bf16.mxu0 %v347
        %393 = vmatpush1.bf16.msra.mxu0 %v346
        %394 = vmatprep.subr.bf16.mxu0 %v350
        %395 = vmatpush1.bf16.msra.mxu0 %v349
        %396 = vmatprep.subr.bf16.mxu0 %v353
        %397 = vmatpush1.bf16.msra.mxu0 %v352
        %398 = vmatprep.subr.bf16.mxu0 %v356
        %399 = vmatpush1.bf16.msra.mxu0 %v355
        %400 = vmatprep.subr.bf16.mxu0 %v359
        %401 = vmatpush1.bf16.msra.mxu0 %v358
        %402 = vmatprep.subr.bf16.mxu0 %v362
        %403 = vmatpush1.bf16.msra.mxu0 %v361
        %404 = vmatprep.subr.bf16.mxu0 0
        %405 = vmatpush1.bf16.msra.mxu0 0
        %406 = vmatprep.subr.bf16.mxu0 0
        %407 = vmatpush1.bf16.msra.mxu0 0
        %408 = vmatprep.subr.bf16.mxu0 0
        %409 = vmatpush1.bf16.msra.mxu0 0
        %410 = vmatprep.subr.bf16.mxu0 0
        %411 = vmatpush1.bf16.msra.mxu0 0
        %412 = vmatprep.subr.bf16.mxu0 0
        %413 = vmatpush1.bf16.msra.mxu0 0
        %414 = vmatprep.subr.bf16.mxu0 0
        %415 = vmatpush1.bf16.msra.mxu0 0
        %416 = vmatprep.subr.bf16.mxu0 0
        %417 = vmatpush1.bf16.msra.mxu0 0
        %418 = vmatprep.subr.bf16.mxu0 0
        %419 = vmatpush1.bf16.msra.mxu0 0
        %420 = vmatprep.mubr.bf16.mxu0 0
        %421 = vmatmul.mubr.bf16.gmra.mrb[0].mxu0 %v227
        %v422 = vpop.f32.mrb[0].mxu0
        %v423 = vadd.f32 0.0, %v422
        %v424 = vpop.f32.mrb[0].mxu0
        %v425 = vadd.f32 0.0, %v424
        %v426 = vpop.f32.mrb[0].mxu0
        %v427 = vpop.f32.mrb[0].mxu0
        %428 = vdwg.mxu0
        %429 = vmatprep.subr.bf16.mxu0 0
        %430 = vmatpush1.bf16.msra.mxu0 %v342
        %431 = vmatprep.subr.bf16.mxu0 0
        %432 = vmatpush1.bf16.msra.mxu0 %v345
        %433 = vmatprep.subr.bf16.mxu0 0
        %434 = vmatpush1.bf16.msra.mxu0 %v348
        %435 = vmatprep.subr.bf16.mxu0 0
        %436 = vmatpush1.bf16.msra.mxu0 %v351
        %437 = vmatprep.subr.bf16.mxu0 0
        %438 = vmatpush1.bf16.msra.mxu0 %v354
        %439 = vmatprep.subr.bf16.mxu0 0
        %440 = vmatpush1.bf16.msra.mxu0 %v357
        %441 = vmatprep.subr.bf16.mxu0 0
        %442 = vmatpush1.bf16.msra.mxu0 %v360
        %443 = vmatprep.subr.bf16.mxu0 0
        %444 = vmatpush1.bf16.msra.mxu0 %v363
        %445 = vmatprep.subr.bf16.mxu0 0
        %446 = vmatpush1.bf16.msra.mxu0 0
        %447 = vmatprep.subr.bf16.mxu0 0
        %448 = vmatpush1.bf16.msra.mxu0 0
        %449 = vmatprep.subr.bf16.mxu0 0
        %450 = vmatpush1.bf16.msra.mxu0 0
        %451 = vmatprep.subr.bf16.mxu0 0
        %452 = vmatpush1.bf16.msra.mxu0 0
        %453 = vmatprep.subr.bf16.mxu0 0
        %454 = vmatpush1.bf16.msra.mxu0 0
        %455 = vmatprep.subr.bf16.mxu0 0
        %456 = vmatpush1.bf16.msra.mxu0 0
        %457 = vmatprep.subr.bf16.mxu0 0
        %458 = vmatpush1.bf16.msra.mxu0 0
        %459 = vmatprep.subr.bf16.mxu0 0
        %460 = vmatpush1.bf16.msra.mxu0 0
        %461 = vmatprep.mubr.bf16.mxu0 0
        %462 = vmatmul.mubr.bf16.gmra.mrb[0].mxu0 %v227
        %v463 = vpop.f32.mrb[0].mxu0
        %v464 = vadd.f32 0.0, %v463
        %v465 = vpop.f32.mrb[0].mxu0
        %v466 = vpop.f32.mrb[0].mxu0
        %v467 = vpop.f32.mrb[0].mxu0
        %468 = vdwg.mxu0
        %v469 = vadd.f32 %v224, %v423
        %v470 = vadd.f32 %v225, %v425
        %v471 = vadd.f32 %v226, %v464
        %472 = vst [vmem:[#allocation2] sm:$0xff] %v469
        %473 = vst [vmem:[#allocation2 + $0x8] sm:$0xff] %v470
        %474 = vst [vmem:[#allocation2 + $0x10] sm:$0xff] %v471
        // Predicated region
        $region41: #{encoder_forward.6} parent=31 // pred_check
          %p475 = pneg %p217
        $region42: #{encoder_forward.6} parent=31 // pred_check_branch
          %477 = sbr.rel (%p475) target = $region44
        $region43: #{encoder_forward.6} parent=31 // pred_region
          %v478 = vld [vmem:[#allocation2] sm:$0xff]
          %v479 = vld [vmem:[#allocation2 + $0x8] sm:$0xff]
          %v480 = vld [vmem:[#allocation2 + $0x10] sm:$0xff]
          %v481 = vld [vmem:[%s2] sm:$0x7]
          %v483 = vlaneseq
          %v484 = vshrl.u32 %v483, 7
          %v485 = vsub.s32 0, %v484
          %v486 = vrot.slane %v481, %v485
          %v487 = vlaneseq
          %v488 = vshrl.u32 %v487, 7
          %v489 = vsub.s32 1, %v488
          %v490 = vrot.slane %v481, %v489
          %v491 = vlaneseq
          %v492 = vshrl.u32 %v491, 7
          %v493 = vsub.s32 2, %v492
          %v494 = vrot.slane %v481, %v493
          %v498 = vadd.f32 %v478, %v486
          %v499 = vadd.f32 %v479, %v490
          %v500 = vadd.f32 %v480, %v494
          %v501 = vpack.c.bf16 %v498, %v498
          %v502 = vpack.c.bf16 %v499, %v499
          %v503 = vpack.c.bf16 %v500, %v500
          %v507 = vunpack.c.l.b16 %v501
          %v508 = vunpack.c.l.b16 %v502
          %v509 = vunpack.c.l.b16 %v503
          %v510 = vpack.c.b16 %v508, %v507
          %v511 = vpack.c.b16 %v509, %v509
          %514 = vst [vmem:[%s215] sm:$0xff] %v510
          %515 = vst [vmem:[%s215 + $0x8] sm:$0xf] %v511
        $region44: #{encoder_forward.6} parent=31 // pred_fallthru
          _
        %p516 = scmp.lt.s32.totalorder %s19, 1
        %s517 = scalar_select %p516, %s19, 1
        %s518 = smul.addr %s517, 3
        %s519 = smul.addr %s518, 4
        %s520 = scalar_lea.vmem %s3, %s519
        // Predicated region
        $region45: #{encoder_forward.6} parent=31 // pred_check
          %p521 = pneg %p120
        $region46: #{encoder_forward.6} parent=31 // pred_check_branch
          %523 = sbr.rel (%p521) target = $region48
        $region47: #{encoder_forward.6} parent=31 // pred_region
          _
        $region48: #{encoder_forward.6} parent=31 // pred_fallthru
          _
      $region32: #{encoder_forward.6} parent=5 // pred_fallthru
        _
      %p524 = scmp.le.s32.totalorder 2, %s10
      // Predicated region
      $region49: #{encoder_forward.6} parent=5 // pred_check
        %p525 = pneg %p524
      $region50: #{encoder_forward.6} parent=5 // pred_check_branch
        %527 = sbr.rel (%p525) target = $region52
      $region51: #{encoder_forward.6} parent=5 // pred_region
        %s528 = ssub.s32 %s10, 2
        // Predicated region
        $region53: #{encoder_forward.6} parent=51 // pred_check
          %p529 = pneg %p126
        $region54: #{encoder_forward.6} parent=51 // pred_check_branch
          %531 = sbr.rel (%p529) target = $region56
        $region55: #{encoder_forward.6} parent=51 // pred_region
          %p532 = scmp.lt.s32.totalorder %s21, 1
          %s533 = scalar_select %p532, %s21, 1
          %s534 = smul.addr %s533, 3
          %s535 = smul.addr %s534, 4
          %s536 = scalar_lea.vmem %s3, %s535
        $region56: #{encoder_forward.6} parent=51 // pred_fallthru
          _
      $region52: #{encoder_forward.6} parent=5 // pred_fallthru
        _
    $region6: #{encoder_forward.6} parent=1 // loop_footer
      %s14 = sadd.s32 1, %s10
    $region7: #{encoder_forward.6} parent=1 // loop_footer_branch
      %9 = sbr.rel target = $region3
    $region8: #{encoder_forward.6} parent=1 // loop_exit
      _
    %537 = vsyncpa [#allocation4], 1
    %s538 = scalar_lea.sflag [#allocation4], 1
    %539 = vsyncpa %s538, 1

// kernel: encoder_forward.7
$region0: #{encoder_forward.7}
  #allocation0 [shape = 'u32[]', space=smem, size = 0x4, offset = 0x4, fixed_abs, tag = 'smem constant byte address 0x4 - core index']
  #allocation1 [shape = 'u32[144,128]{1,0:T(1,128)}', space=vmem, size = 0x12000, scoped, tag = 'internal scratch']
  %s0 = inlined_call_operand.vmem [shape: bf16[2,8,32], index: 0, kind: input, shape index: {}]
  %s1 = inlined_call_operand.vmem [shape: bf16[2,8,32], index: 1, kind: input, shape index: {}]
  %s2 = inlined_call_operand.vmem [shape: bf16[2,8,32], index: 2, kind: input, shape index: {}]
  %s3 = inlined_call_operand.vmem [shape: bf16[2,8,32], index: 3, kind: output, shape index: {}]
  %s4 = sld [smem:[#allocation0]]
  $region45: #{encoder_forward.7} parent=0
    _
  %s6 = ssub.s32 1, %s4
  %s7 = scalar_select 0, %s6, %s4
  loop: start=0, step=1, limit=4
  $region2: #{encoder_forward.7} parent=0 // loop_pre_header
    _
  $region3: #{encoder_forward.7} parent=0 // loop_header
    %s9 = sphi 0, %s13
    %p10 = scmp.ge.s32.totalorder %s9, 4
    %s19 = sphi 0, %s21
    %s22 = sphi 0, %s19
    %s23 = sphi 0, %s22
    %s39 = sphi 0, %s23
    %s45 = sphi 0, %s47
    %s48 = sphi 0, %s45
    %s49 = sphi 0, %s48
    %s65 = sphi 0, %s49
    %s71 = sphi 0, %s73
    %s74 = sphi 0, %s71
    %s75 = sphi 0, %s74
    %s91 = sphi 0, %s75
    %s97 = sphi 0, %s99
    %s100 = sphi 0, %s97
    %s101 = sphi 0, %s100
    %s117 = sphi 0, %s101
  $region4: #{encoder_forward.7} parent=0 // loop_header_branch
    %12 = sbr.rel (%p10) target = $region8
  $region5: #{encoder_forward.7} parent=0 // loop_body
    %s14 = ssub.s32 %s9, 1
    %s15 = ssub.s32 %s9, 2
    %s16 = sadd.s32 %s9, 1
    %s17 = ssub.s32 %s9, %s16
    %p18 = scmp.eq.s32.totalorder %s17, 0
    %s20 = sadd.s32 %s19, 1
    %s21 = scalar_select %p18, %s19, %s20
    %p24 = pneg %p18
    %p25 = scmp.eq.s32.totalorder %s9, 1
    %p26 = por %p24, %p25
    %p27 = scmp.ne.s32.totalorder %s19, %s22
    %p28 = scmp.eq.s32.totalorder %s9, 0
    %p29 = por %p27, %p28
    %p30 = scmp.ne.s32.totalorder %s19, %s22
    %p31 = scmp.eq.s32.totalorder %s14, 1
    %p32 = por %p30, %p31
    %p33 = scmp.ne.s32.totalorder %s22, %s23
    %p34 = scmp.eq.s32.totalorder %s14, 0
    %p35 = por %p33, %p34
    %p36 = scmp.ne.s32.totalorder %s22, %s23
    %p37 = scmp.eq.s32.totalorder %s15, 1
    %p38 = por %p36, %p37
    %p40 = scmp.ne.s32.totalorder %s23, %s39
    %p41 = scmp.eq.s32.totalorder %s15, 0
    %p42 = por %p40, %p41
    %s43 = ssub.s32 %s9, %s16
    %p44 = scmp.eq.s32.totalorder %s43, 0
    %s46 = sadd.s32 %s45, 1
    %s47 = scalar_select %p44, %s45, %s46
    %p50 = pneg %p44
    %p51 = scmp.eq.s32.totalorder %s9, 1
    %p52 = por %p50, %p51
    %p53 = scmp.ne.s32.totalorder %s45, %s48
    %p54 = scmp.eq.s32.totalorder %s9, 0
    %p55 = por %p53, %p54
    %p56 = scmp.ne.s32.totalorder %s45, %s48
    %p57 = scmp.eq.s32.totalorder %s14, 1
    %p58 = por %p56, %p57
    %p59 = scmp.ne.s32.totalorder %s48, %s49
    %p60 = scmp.eq.s32.totalorder %s14, 0
    %p61 = por %p59, %p60
    %p62 = scmp.ne.s32.totalorder %s48, %s49
    %p63 = scmp.eq.s32.totalorder %s15, 1
    %p64 = por %p62, %p63
    %p66 = scmp.ne.s32.totalorder %s49, %s65
    %p67 = scmp.eq.s32.totalorder %s15, 0
    %p68 = por %p66, %p67
    %s69 = ssub.s32 %s9, %s16
    %p70 = scmp.eq.s32.totalorder %s69, 0
    %s72 = sadd.s32 %s71, 1
    %s73 = scalar_select %p70, %s71, %s72
    %p76 = pneg %p70
    %p77 = scmp.eq.s32.totalorder %s9, 1
    %p78 = por %p76, %p77
    %p79 = scmp.ne.s32.totalorder %s71, %s74
    %p80 = scmp.eq.s32.totalorder %s9, 0
    %p81 = por %p79, %p80
    %p82 = scmp.ne.s32.totalorder %s71, %s74
    %p83 = scmp.eq.s32.totalorder %s14, 1
    %p84 = por %p82, %p83
    %p85 = scmp.ne.s32.totalorder %s74, %s75
    %p86 = scmp.eq.s32.totalorder %s14, 0
    %p87 = por %p85, %p86
    %p88 = scmp.ne.s32.totalorder %s74, %s75
    %p89 = scmp.eq.s32.totalorder %s15, 1
    %p90 = por %p88, %p89
    %p92 = scmp.ne.s32.totalorder %s75, %s91
    %p93 = scmp.eq.s32.totalorder %s15, 0
    %p94 = por %p92, %p93
    %s95 = ssub.s32 %s9, %s16
    %p96 = scmp.eq.s32.totalorder %s95, 0
    %s98 = sadd.s32 %s97, 1
    %s99 = scalar_select %p96, %s97, %s98
    %p102 = pneg %p96
    %p103 = scmp.eq.s32.totalorder %s9, 1
    %p104 = por %p102, %p103
    %p105 = scmp.ne.s32.totalorder %s97, %s100
    %p106 = scmp.eq.s32.totalorder %s9, 0
    %p107 = por %p105, %p106
    %p108 = scmp.ne.s32.totalorder %s97, %s100
    %p109 = scmp.eq.s32.totalorder %s14, 1
    %p110 = por %p108, %p109
    %p111 = scmp.ne.s32.totalorder %s100, %s101
    %p112 = scmp.eq.s32.totalorder %s14, 0
    %p113 = por %p111, %p112
    %p114 = scmp.ne.s32.totalorder %s100, %s101
    %p115 = scmp.eq.s32.totalorder %s15, 1
    %p116 = por %p114, %p115
    %p118 = scmp.ne.s32.totalorder %s101, %s117
    %p119 = scmp.eq.s32.totalorder %s15, 0
    %p120 = por %p118, %p119
    %p121 = scmp.le.s32.totalorder 1, %s9
    %p122 = scmp.lt.s32.totalorder %s9, 3
    %p123 = pnand %p121, %p122
    %p124 = pneg %p123
    // Predicated region
    $region9: #{encoder_forward.7} parent=5 // pred_check
      _
    $region10: #{encoder_forward.7} parent=5 // pred_check_branch
      %126 = sbr.rel (%p123) target = $region12
    $region11: #{encoder_forward.7} parent=5 // pred_region
      %s127 = ssub.s32 %s9, 1
    $region12: #{encoder_forward.7} parent=5 // pred_fallthru
      _
    %p128 = scmp.lt.s32.totalorder %s9, 2
    // Predicated region
    $region13: #{encoder_forward.7} parent=5 // pred_check
      %p129 = pneg %p128
    $region14: #{encoder_forward.7} parent=5 // pred_check_branch
      %131 = sbr.rel (%p129) target = $region16
    $region15: #{encoder_forward.7} parent=5 // pred_region
      // Predicated region
      $region17: #{encoder_forward.7} parent=15 // pred_check
        %p132 = pneg %p29
      $region18: #{encoder_forward.7} parent=15 // pred_check_branch
        %134 = sbr.rel (%p132) target = $region20
      $region19: #{encoder_forward.7} parent=15 // pred_region
        %p135 = scmp.lt.s32.totalorder %s9, 1
        %s136 = scalar_select %p135, %s9, 1
        %s137 = smul.addr %s136, 4
        %s138 = scalar_lea.vmem %s0, %s137
      $region20: #{encoder_forward.7} parent=15 // pred_fallthru
        _
      // Predicated region
      $region21: #{encoder_forward.7} parent=15 // pred_check
        %p139 = pneg %p55
      $region22: #{encoder_forward.7} parent=15 // pred_check_branch
        %141 = sbr.rel (%p139) target = $region24
      $region23: #{encoder_forward.7} parent=15 // pred_region
        %p142 = scmp.lt.s32.totalorder %s9, 1
        %s143 = scalar_select %p142, %s9, 1
        %s144 = smul.addr %s143, 4
        %s145 = scalar_lea.vmem %s1, %s144
      $region24: #{encoder_forward.7} parent=15 // pred_fallthru
        _
      // Predicated region
      $region25: #{encoder_forward.7} parent=15 // pred_check
        %p146 = pneg %p81
      $region26: #{encoder_forward.7} parent=15 // pred_check_branch
        %148 = sbr.rel (%p146) target = $region28
      $region27: #{encoder_forward.7} parent=15 // pred_region
        %p149 = scmp.lt.s32.totalorder %s9, 1
        %s150 = scalar_select %p149, %s9, 1
        %s151 = smul.addr %s150, 4
        %s152 = scalar_lea.vmem %s2, %s151
      $region28: #{encoder_forward.7} parent=15 // pred_fallthru
        _
    $region16: #{encoder_forward.7} parent=5 // pred_fallthru
      _
    %p153 = scmp.le.s32.totalorder 1, %s9
    %p154 = scmp.lt.s32.totalorder %s9, 3
    %p155 = pnand %p153, %p154
    %p156 = pneg %p155
    // Predicated region
    $region29: #{encoder_forward.7} parent=5 // pred_check
      _
    $region30: #{encoder_forward.7} parent=5 // pred_check_branch
      %158 = sbr.rel (%p155) target = $region32
    $region31: #{encoder_forward.7} parent=5 // pred_region
      %s159 = ssub.s32 %s9, 1
      %p160 = scmp.lt.s32.totalorder %s14, 1
      %s161 = scalar_select %p160, %s14, 1
      %s162 = smul.addr %s161, 4
      %s163 = scalar_lea.vmem %s0, %s162
      %p164 = pneg %p35
      %p165 = pneg %p32
      %p166 = scmp.lt.s32.totalorder %s14, 1
      %s167 = scalar_select %p166, %s14, 1
      %s168 = smul.addr %s167, 4
      %s169 = scalar_lea.vmem %s1, %s168
      %p170 = pneg %p61
      %p171 = pneg %p58
      %p172 = scmp.lt.s32.totalorder %s14, 1
      %s173 = scalar_select %p172, %s14, 1
      %s174 = smul.addr %s173, 4
      %s175 = scalar_lea.vmem %s2, %s174
      %p176 = pneg %p87
      %p177 = pneg %p84
      %p178 = pneg %p113
      %p179 = pneg %p110
      %p180 = scmp.lt.s32.totalorder %s14, 1
      %s181 = scalar_select %p180, %s14, 1
      %s182 = smul.addr %s181, 4
      %s183 = scalar_lea.vmem %s3, %s182
      %p184 = scmp.lt.s32.totalorder %s14, 1
      %s185 = scalar_select %p184, %s14, 1
      %s186 = smul.addr %s185, 4
      %s187 = scalar_lea.vmem %s0, %s186
      %p188 = scmp.lt.s32.totalorder %s14, 1
      %s189 = scalar_select %p188, %s14, 1
      %s190 = smul.addr %s189, 4
      %s191 = scalar_lea.vmem %s1, %s190
      %p192 = scmp.lt.s32.totalorder %s14, 1
      %s193 = scalar_select %p192, %s14, 1
      %s194 = smul.addr %s193, 4
      %s195 = scalar_lea.vmem %s2, %s194
      %p196 = scmp.lt.s32.totalorder %s14, 1
      %s197 = scalar_select %p196, %s14, 1
      %s198 = smul.addr %s197, 4
      %s199 = scalar_lea.vmem %s3, %s198
      %v201 = vld [vmem:[%s187] sm:$0xf]
      %v202 = vld [vmem:[%s191] sm:$0xf]
      %vm203 = vcmask 261120
      %v205 = vsel %vm203, %v201, 0
      %v208 = vsel %vm203, %v202, 0
      %210 = vmatprep.subr.bf16.mxu0 0
      %211 = vmatpush1.bf16.xpose.msra.mxu0 %v208
      %212 = vmatprep.subr.bf16.mxu0 0
      %213 = vmatpush1.bf16.xpose.msra.mxu0 0
      %214 = vmatprep.subr.bf16.mxu0 0
      %215 = vmatpush1.bf16.xpose.msra.mxu0 0
      %216 = vmatprep.subr.bf16.mxu0 0
      %217 = vmatpush1.bf16.xpose.msra.mxu0 0
      %218 = vmatprep.subr.bf16.mxu0 0
      %219 = vmatpush1.bf16.xpose.msra.mxu0 0
      %220 = vmatprep.subr.bf16.mxu0 0
      %221 = vmatpush1.bf16.xpose.msra.mxu0 0
      %222 = vmatprep.subr.bf16.mxu0 0
      %223 = vmatpush1.bf16.xpose.msra.mxu0 0
      %224 = vmatprep.subr.bf16.mxu0 0
      %225 = vmatpush1.bf16.xpose.msra.mxu0 0
      %226 = vmatprep.subr.bf16.mxu0 0
      %227 = vmatpush1.bf16.xpose.msra.mxu0 0
      %228 = vmatprep.subr.bf16.mxu0 0
      %229 = vmatpush1.bf16.xpose.msra.mxu0 0
      %230 = vmatprep.subr.bf16.mxu0 0
      %231 = vmatpush1.bf16.xpose.msra.mxu0 0
      %232 = vmatprep.subr.bf16.mxu0 0
      %233 = vmatpush1.bf16.xpose.msra.mxu0 0
      %234 = vmatprep.subr.bf16.mxu0 0
      %235 = vmatpush1.bf16.xpose.msra.mxu0 0
      %236 = vmatprep.subr.bf16.mxu0 0
      %237 = vmatpush1.bf16.xpose.msra.mxu0 0
      %238 = vmatprep.subr.bf16.mxu0 0
      %239 = vmatpush1.bf16.xpose.msra.mxu0 0
      %240 = vmatprep.subr.bf16.mxu0 0
      %241 = vmatpush1.bf16.xpose.msra.mxu0 0
      %242 = vmatprep.mubr.bf16.mxu0 0
      %243 = vmatmul.mubr.bf16.gmra.mrb[0].mxu0 %v205
      %v244 = vpop.f32.mrb[0].mxu0
      %v245 = vadd.f32 0.0, %v244
      %v246 = vpop.f32.mrb[0].mxu0
      %v247 = vpop.f32.mrb[0].mxu0
      %v248 = vpop.f32.mrb[0].mxu0
      %249 = vdwg.mxu0
      %v250 = vmul.f32 %v245, 0.17677669
      %v251 = vpack.c.bf16 %v250, %v250
      %v252 = vld [vmem:[%s195] sm:$0xf]
      %vm253 = vcmask 64512
      %v255 = vsel %vm253, %v251, 0
      %vm257 = vcmask 1043456
      %v259 = vsel %vm257, %v252, 0
      %261 = vmatprep.subr.bf16.mxu0 0
      %262 = vmatpush1.bf16.msra.mxu0 %v259
      %263 = vmatprep.subr.bf16.mxu0 0
      %264 = vmatpush1.bf16.msra.mxu0 0
      %265 = vmatprep.subr.bf16.mxu0 0
      %266 = vmatpush1.bf16.msra.mxu0 0
      %267 = vmatprep.subr.bf16.mxu0 0
      %268 = vmatpush1.bf16.msra.mxu0 0
      %269 = vmatprep.subr.bf16.mxu0 0
      %270 = vmatpush1.bf16.msra.mxu0 0
      %271 = vmatprep.subr.bf16.mxu0 0
      %272 = vmatpush1.bf16.msra.mxu0 0
      %273 = vmatprep.subr.bf16.mxu0 0
      %274 = vmatpush1.bf16.msra.mxu0 0
      %275 = vmatprep.subr.bf16.mxu0 0
      %276 = vmatpush1.bf16.msra.mxu0 0
      %277 = vmatprep.subr.bf16.mxu0 0
      %278 = vmatpush1.bf16.msra.mxu0 0
      %279 = vmatprep.subr.bf16.mxu0 0
      %280 = vmatpush1.bf16.msra.mxu0 0
      %281 = vmatprep.subr.bf16.mxu0 0
      %282 = vmatpush1.bf16.msra.mxu0 0
      %283 = vmatprep.subr.bf16.mxu0 0
      %284 = vmatpush1.bf16.msra.mxu0 0
      %285 = vmatprep.subr.bf16.mxu0 0
      %286 = vmatpush1.bf16.msra.mxu0 0
      %287 = vmatprep.subr.bf16.mxu0 0
      %288 = vmatpush1.bf16.msra.mxu0 0
      %289 = vmatprep.subr.bf16.mxu0 0
      %290 = vmatpush1.bf16.msra.mxu0 0
      %291 = vmatprep.subr.bf16.mxu0 0
      %292 = vmatpush1.bf16.msra.mxu0 0
      %293 = vmatprep.mubr.bf16.mxu0 0
      %294 = vmatmul.mubr.bf16.gmra.mrb[0].mxu0 %v255
      %v295 = vpop.f32.mrb[0].mxu0
      %v296 = vadd.f32 0.0, %v295
      %v297 = vpop.f32.mrb[0].mxu0
      %v298 = vpop.f32.mrb[0].mxu0
      %v299 = vpop.f32.mrb[0].mxu0
      %300 = vdwg.mxu0
      %v301 = vpack.c.bf16 %v296, %v296
      %vm302 = vcmask 257024
      %303 = vst.msk [vmem:[%s199] sm:$0xf] %vm302, %v301
      %p304 = scmp.lt.s32.totalorder %s14, 1
      %s305 = scalar_select %p304, %s14, 1
      %s306 = smul.addr %s305, 4
      %s307 = scalar_lea.vmem %s3, %s306
      // Predicated region
      $region33: #{encoder_forward.7} parent=31 // pred_check
        %p308 = pneg %p110
      $region34: #{encoder_forward.7} parent=31 // pred_check_branch
        %310 = sbr.rel (%p308) target = $region36
      $region35: #{encoder_forward.7} parent=31 // pred_region
        _
      $region36: #{encoder_forward.7} parent=31 // pred_fallthru
        _
    $region32: #{encoder_forward.7} parent=5 // pred_fallthru
      _
    %p311 = scmp.le.s32.totalorder 2, %s9
    // Predicated region
    $region37: #{encoder_forward.7} parent=5 // pred_check
      %p312 = pneg %p311
    $region38: #{encoder_forward.7} parent=5 // pred_check_branch
      %314 = sbr.rel (%p312) target = $region40
    $region39: #{encoder_forward.7} parent=5 // pred_region
      %s315 = ssub.s32 %s9, 2
      // Predicated region
      $region41: #{encoder_forward.7} parent=39 // pred_check
        %p316 = pneg %p116
      $region42: #{encoder_forward.7} parent=39 // pred_check_branch
        %318 = sbr.rel (%p316) target = $region44
      $region43: #{encoder_forward.7} parent=39 // pred_region
        %p319 = scmp.lt.s32.totalorder %s15, 1
        %s320 = scalar_select %p319, %s15, 1
        %s321 = smul.addr %s320, 4
        %s322 = scalar_lea.vmem %s3, %s321
      $region44: #{encoder_forward.7} parent=39 // pred_fallthru
        _
    $region40: #{encoder_forward.7} parent=5 // pred_fallthru
      _
  $region6: #{encoder_forward.7} parent=0 // loop_footer
    %s13 = sadd.s32 1, %s9
  $region7: #{encoder_forward.7} parent=0 // loop_footer_branch
    %8 = sbr.rel target = $region3
  $region8: #{encoder_forward.7} parent=0 // loop_exit
    _

// kernel: encoder_forward.8
$region0: #{encoder_forward.8}
  #allocation0 [shape = 'u32[]', space=smem, size = 0x4, offset = 0x4, fixed_abs, tag = 'smem constant byte address 0x4 - core index']
  #allocation1 [shape = 'u32[144,128]{1,0:T(1,128)}', space=vmem, size = 0x12000, scoped, tag = 'internal scratch']
  %s0 = inlined_call_operand.vmem [shape: bf16[16,128], index: 0, kind: input, shape index: {}]
  %s1 = inlined_call_operand.vmem [shape: bf16[128,128], index: 1, kind: input, shape index: {}]
  %s2 = inlined_call_operand.vmem [shape: f32[1,128], index: 2, kind: input, shape index: {}]
  %s3 = inlined_call_operand.vmem [shape: f32[16,128], index: 3, kind: input, shape index: {}]
  %s4 = inlined_call_operand.vmem [shape: f32[16,128], index: 4, kind: output, shape index: {}]
  %s5 = sld [smem:[#allocation0]]
  $region57: #{encoder_forward.8} parent=0
    _
  %s7 = ssub.s32 1, %s5
  %s8 = scalar_select 0, %s7, %s5
  loop: start=0, step=1, limit=4
  $region2: #{encoder_forward.8} parent=0 // loop_pre_header
    _
  $region3: #{encoder_forward.8} parent=0 // loop_header
    %s10 = sphi 0, %s14
    %p11 = scmp.ge.s32.totalorder %s10, 4
    %s17 = sphi 0, %s29
    %s18 = sphi 0, %s25
    %s19 = sphi 0, %s17
    %s20 = sphi 0, %s18
    %s21 = sphi 0, %s19
    %s22 = sphi 0, %s20
    %s34 = sphi 0, %s36
    %s37 = sphi 0, %s34
    %s38 = sphi 0, %s37
    %s54 = sphi 0, %s38
    %s60 = sphi 0, %s62
    %s63 = sphi 0, %s60
    %s64 = sphi 0, %s63
    %s80 = sphi 0, %s64
    %s84 = sphi 0, %s84
    %s86 = sphi 0, %s84
    %s87 = sphi 0, %s86
    %s101 = sphi 0, %s87
    %s107 = sphi 0, %s109
    %s110 = sphi 0, %s107
    %s111 = sphi 0, %s110
    %s127 = sphi 0, %s111
    %s133 = sphi 0, %s135
    %s136 = sphi 0, %s133
    %s137 = sphi 0, %s136
    %s153 = sphi 0, %s137
  $region4: #{encoder_forward.8} parent=0 // loop_header_branch
    %13 = sbr.rel (%p11) target = $region8
  $region5: #{encoder_forward.8} parent=0 // loop_body
    %s15 = ssub.s32 %s10, 1
    %s16 = ssub.s32 %s10, 2
    %s23 = sadd.s32 1, %s18
    %p24 = scmp.ge.s32.totalorder %s23, 1
    %s25 = scalar_select %p24, 0, %s23
    %s26 = sadd.s32 1, %s17
    %s27 = scalar_select %p24, %s26, %s17
    %p28 = scmp.ge.s32.totalorder %s27, 2
    %s29 = scalar_select %p28, 0, %s27
    %s30 = ssub.s32 %s17, %s29
    %s31 = ssub.s32 %s18, %s25
    %s32 = sor.u32 %s30, %s31
    %p33 = scmp.eq.s32.totalorder %s32, 0
    %s35 = sadd.s32 %s34, 1
    %s36 = scalar_select %p33, %s34, %s35
    %p39 = pneg %p33
    %p40 = scmp.eq.s32.totalorder %s10, 1
    %p41 = por %p39, %p40
    %p42 = scmp.ne.s32.totalorder %s34, %s37
    %p43 = scmp.eq.s32.totalorder %s10, 0
    %p44 = por %p42, %p43
    %p45 = scmp.ne.s32.totalorder %s34, %s37
    %p46 = scmp.eq.s32.totalorder %s15, 1
    %p47 = por %p45, %p46
    %p48 = scmp.ne.s32.totalorder %s37, %s38
    %p49 = scmp.eq.s32.totalorder %s15, 0
    %p50 = por %p48, %p49
    %p51 = scmp.ne.s32.totalorder %s37, %s38
    %p52 = scmp.eq.s32.totalorder %s16, 1
    %p53 = por %p51, %p52
    %p55 = scmp.ne.s32.totalorder %s38, %s54
    %p56 = scmp.eq.s32.totalorder %s16, 0
    %p57 = por %p55, %p56
    %s58 = ssub.s32 %s18, %s25
    %p59 = scmp.eq.s32.totalorder %s58, 0
    %s61 = sadd.s32 %s60, 1
    %s62 = scalar_select %p59, %s60, %s61
    %p65 = pneg %p59
    %p66 = scmp.eq.s32.totalorder %s10, 1
    %p67 = por %p65, %p66
    %p68 = scmp.ne.s32.totalorder %s60, %s63
    %p69 = scmp.eq.s32.totalorder %s10, 0
    %p70 = por %p68, %p69
    %p71 = scmp.ne.s32.totalorder %s60, %s63
    %p72 = scmp.eq.s32.totalorder %s15, 1
    %p73 = por %p71, %p72
    %p74 = scmp.ne.s32.totalorder %s63, %s64
    %p75 = scmp.eq.s32.totalorder %s15, 0
    %p76 = por %p74, %p75
    %p77 = scmp.ne.s32.totalorder %s63, %s64
    %p78 = scmp.eq.s32.totalorder %s16, 1
    %p79 = por %p77, %p78
    %p81 = scmp.ne.s32.totalorder %s64, %s80
    %p82 = scmp.eq.s32.totalorder %s16, 0
    %p83 = por %p81, %p82
    %s85 = sadd.s32 %s84, 1
    %p88 = scmp.eq.s32.totalorder %s10, 1
    %p89 = scmp.ne.s32.totalorder %s84, %s86
    %p90 = scmp.eq.s32.totalorder %s10, 0
    %p91 = por %p89, %p90
    %p92 = scmp.ne.s32.totalorder %s84, %s86
    %p93 = scmp.eq.s32.totalorder %s15, 1
    %p94 = por %p92, %p93
    %p95 = scmp.ne.s32.totalorder %s86, %s87
    %p96 = scmp.eq.s32.totalorder %s15, 0
    %p97 = por %p95, %p96
    %p98 = scmp.ne.s32.totalorder %s86, %s87
    %p99 = scmp.eq.s32.totalorder %s16, 1
    %p100 = por %p98, %p99
    %p102 = scmp.ne.s32.totalorder %s87, %s101
    %p103 = scmp.eq.s32.totalorder %s16, 0
    %p104 = por %p102, %p103
    %s105 = ssub.s32 %s17, %s29
    %p106 = scmp.eq.s32.totalorder %s105, 0
    %s108 = sadd.s32 %s107, 1
    %s109 = scalar_select %p106, %s107, %s108
    %p112 = pneg %p106
    %p113 = scmp.eq.s32.totalorder %s10, 1
    %p114 = por %p112, %p113
    %p115 = scmp.ne.s32.totalorder %s107, %s110
    %p116 = scmp.eq.s32.totalorder %s10, 0
    %p117 = por %p115, %p116
    %p118 = scmp.ne.s32.totalorder %s107, %s110
    %p119 = scmp.eq.s32.totalorder %s15, 1
    %p120 = por %p118, %p119
    %p121 = scmp.ne.s32.totalorder %s110, %s111
    %p122 = scmp.eq.s32.totalorder %s15, 0
    %p123 = por %p121, %p122
    %p124 = scmp.ne.s32.totalorder %s110, %s111
    %p125 = scmp.eq.s32.totalorder %s16, 1
    %p126 = por %p124, %p125
    %p128 = scmp.ne.s32.totalorder %s111, %s127
    %p129 = scmp.eq.s32.totalorder %s16, 0
    %p130 = por %p128, %p129
    %s131 = ssub.s32 %s17, %s29
    %p132 = scmp.eq.s32.totalorder %s131, 0
    %s134 = sadd.s32 %s133, 1
    %s135 = scalar_select %p132, %s133, %s134
    %p138 = pneg %p132
    %p139 = scmp.eq.s32.totalorder %s10, 1
    %p140 = por %p138, %p139
    %p141 = scmp.ne.s32.totalorder %s133, %s136
    %p142 = scmp.eq.s32.totalorder %s10, 0
    %p143 = por %p141, %p142
    %p144 = scmp.ne.s32.totalorder %s133, %s136
    %p145 = scmp.eq.s32.totalorder %s15, 1
    %p146 = por %p144, %p145
    %p147 = scmp.ne.s32.totalorder %s136, %s137
    %p148 = scmp.eq.s32.totalorder %s15, 0
    %p149 = por %p147, %p148
    %p150 = scmp.ne.s32.totalorder %s136, %s137
    %p151 = scmp.eq.s32.totalorder %s16, 1
    %p152 = por %p150, %p151
    %p154 = scmp.ne.s32.totalorder %s137, %s153
    %p155 = scmp.eq.s32.totalorder %s16, 0
    %p156 = por %p154, %p155
    %p157 = scmp.le.s32.totalorder 1, %s10
    %p158 = scmp.lt.s32.totalorder %s10, 3
    %p159 = pnand %p157, %p158
    %p160 = pneg %p159
    // Predicated region
    $region9: #{encoder_forward.8} parent=5 // pred_check
      _
    $region10: #{encoder_forward.8} parent=5 // pred_check_branch
      %162 = sbr.rel (%p159) target = $region12
    $region11: #{encoder_forward.8} parent=5 // pred_region
      %s163 = ssub.s32 %s10, 1
      // Predicated region
      $region13: #{encoder_forward.8} parent=11 // pred_check
        %p164 = pneg %p76
      $region14: #{encoder_forward.8} parent=11 // pred_check_branch
        %166 = sbr.rel (%p164) target = $region16
      $region15: #{encoder_forward.8} parent=11 // pred_region
        %s167 = smul.u32 16, %s20
        %p168 = scmp.lt.s32.totalorder %s167, 15
        %s169 = scalar_select %p168, %s167, 15
        %s170 = smul.addr %s169, 4
        %s171 = scalar_lea.vmem %s1, %s170
        %s172 = smul.u32 16, %s20
      $region16: #{encoder_forward.8} parent=11 // pred_fallthru
        _
      // Predicated region
      $region17: #{encoder_forward.8} parent=11 // pred_check
        %p173 = pneg %p97
      $region18: #{encoder_forward.8} parent=11 // pred_check_branch
        %175 = sbr.rel (%p173) target = $region20
      $region19: #{encoder_forward.8} parent=11 // pred_region
        _
      $region20: #{encoder_forward.8} parent=11 // pred_fallthru
        _
    $region12: #{encoder_forward.8} parent=5 // pred_fallthru
      _
    %p176 = scmp.lt.s32.totalorder %s10, 2
    // Predicated region
    $region21: #{encoder_forward.8} parent=5 // pred_check
      %p177 = pneg %p176
    $region22: #{encoder_forward.8} parent=5 // pred_check_branch
      %179 = sbr.rel (%p177) target = $region24
    $region23: #{encoder_forward.8} parent=5 // pred_region
      // Predicated region
      $region25: #{encoder_forward.8} parent=23 // pred_check
        %p180 = pneg %p44
      $region26: #{encoder_forward.8} parent=23 // pred_check_branch
        %182 = sbr.rel (%p180) target = $region28
      $region27: #{encoder_forward.8} parent=23 // pred_region
        %p183 = scmp.lt.s32.totalorder %s17, 1
        %s184 = scalar_select %p183, %s17, 1
        %p185 = scmp.lt.s32.totalorder %s18, 0
        %s186 = scalar_select %p185, %s18, 0
        %s187 = sadd.s32 %s186, %s184
        %s188 = smul.addr %s187, 4
        %s189 = scalar_lea.vmem %s0, %s188
      $region28: #{encoder_forward.8} parent=23 // pred_fallthru
        _
      // Predicated region
      $region29: #{encoder_forward.8} parent=23 // pred_check
        %p190 = pneg %p117
      $region30: #{encoder_forward.8} parent=23 // pred_check_branch
        %192 = sbr.rel (%p190) target = $region32
      $region31: #{encoder_forward.8} parent=23 // pred_region
        %p193 = scmp.lt.s32.totalorder %s17, 1
        %s194 = scalar_select %p193, %s17, 1
        %s195 = smul.addr %s194, 8
        %s196 = scalar_lea.vmem %s3, %s195
      $region32: #{encoder_forward.8} parent=23 // pred_fallthru
        _
    $region24: #{encoder_forward.8} parent=5 // pred_fallthru
      _
    %p197 = scmp.le.s32.totalorder 1, %s10
    %p198 = scmp.lt.s32.totalorder %s10, 3
    %p199 = pnand %p197, %p198
    %p200 = pneg %p199
    // Predicated region
    $region33: #{encoder_forward.8} parent=5 // pred_check
      _
    $region34: #{encoder_forward.8} parent=5 // pred_check_branch
      %202 = sbr.rel (%p199) target = $region36
    $region35: #{encoder_forward.8} parent=5 // pred_region
      %s203 = ssub.s32 %s10, 1
      %p204 = scmp.lt.s32.totalorder %s19, 1
      %s205 = scalar_select %p204, %s19, 1
      %p206 = scmp.lt.s32.totalorder %s20, 0
      %s207 = scalar_select %p206, %s20, 0
      %s208 = sadd.s32 %s207, %s205
      %s209 = smul.addr %s208, 4
      %s210 = scalar_lea.vmem %s0, %s209
      %p211 = pneg %p50
      %p212 = pneg %p47
      %s213 = smul.u32 16, %s20
      %p214 = scmp.lt.s32.totalorder %s213, 15
      %s215 = scalar_select %p214, %s213, 15
      %s216 = smul.addr %s215, 4
      %s217 = scalar_lea.vmem %s1, %s216
      %p218 = pneg %p76
      %p219 = pneg %p73
      %p220 = pneg %p97
      %p221 = pneg %p94
      %p222 = scmp.lt.s32.totalorder %s19, 1
      %s223 = scalar_select %p222, %s19, 1
      %s224 = smul.addr %s223, 8
      %s225 = scalar_lea.vmem %s3, %s224
      %p226 = pneg %p123
      %p227 = pneg %p120
      %p228 = pneg %p149
      %p229 = pneg %p146
      %p230 = scmp.lt.s32.totalorder %s19, 1
      %s231 = scalar_select %p230, %s19, 1
      %s232 = smul.addr %s231, 8
      %s233 = scalar_lea.vmem %s4, %s232
      %p234 = scmp.lt.s32.totalorder %s19, 1
      %s235 = scalar_select %p234, %s19, 1
      %p236 = scmp.lt.s32.totalorder %s20, 0
      %s237 = scalar_select %p236, %s20, 0
      %s238 = sadd.s32 %s237, %s235
      %s239 = smul.addr %s238, 4
      %s240 = scalar_lea.vmem %s0, %s239
      %s241 = smul.u32 16, %s20
      %p242 = scmp.lt.s32.totalorder %s241, 15
      %s243 = scalar_select %p242, %s241, 15
      %s244 = smul.addr %s243, 4
      %s245 = scalar_lea.vmem %s1, %s244
      %s246 = smul.u32 16, %s20
      %p247 = scmp.lt.s32.totalorder %s19, 1
      %s248 = scalar_select %p247, %s19, 1
      %s249 = smul.addr %s248, 8
      %s250 = scalar_lea.vmem %s3, %s249
      %p251 = scmp.lt.s32.totalorder %s19, 1
      %s252 = scalar_select %p251, %s19, 1
      %s253 = smul.addr %s252, 8
      %s254 = scalar_lea.vmem %s4, %s253
      %p256 = scmp.eq.s32.totalorder %s20, 0
      // Predicated region
      $region37: #{encoder_forward.8} parent=35 // pred_check
        %p257 = pneg %p256
      $region38: #{encoder_forward.8} parent=35 // pred_check_branch
        %259 = sbr.rel (%p257) target = $region40
      $region39: #{encoder_forward.8} parent=35 // pred_region
        %260 = vst [vmem:[%s254] sm:$0xff] 0.0
      $region40: #{encoder_forward.8} parent=35 // pred_fallthru
        _
      %v261 = vld [vmem:[%s254] sm:$0xff]
      %v262 = vld [vmem:[%s240] sm:$0xf]
      %v263 = vld [vmem:[%s245] sm:$0xf]
      %v264 = vld [vmem:[%s245 + $0x4] sm:$0xf]
      %v265 = vld [vmem:[%s245 + $0x8] sm:$0xf]
      %v266 = vld [vmem:[%s245 + $0xc] sm:$0xf]
      %v267 = vld [vmem:[%s245 + $0x10] sm:$0xf]
      %v268 = vld [vmem:[%s245 + $0x14] sm:$0xf]
      %v269 = vld [vmem:[%s245 + $0x18] sm:$0xf]
      %v270 = vld [vmem:[%s245 + $0x1c] sm:$0xf]
      %v271 = vld [vmem:[%s245 + $0x20] sm:$0xf]
      %v272 = vld [vmem:[%s245 + $0x24] sm:$0xf]
      %v273 = vld [vmem:[%s245 + $0x28] sm:$0xf]
      %v274 = vld [vmem:[%s245 + $0x2c] sm:$0xf]
      %v275 = vld [vmem:[%s245 + $0x30] sm:$0xf]
      %v276 = vld [vmem:[%s245 + $0x34] sm:$0xf]
      %v277 = vld [vmem:[%s245 + $0x38] sm:$0xf]
      %v278 = vld [vmem:[%s245 + $0x3c] sm:$0xf]
      %v295 = vunpack.c.l.b16 %v263
      %v296 = vunpack.c.l.b16 %v264
      %v297 = vunpack.c.l.b16 %v265
      %v298 = vunpack.c.l.b16 %v266
      %v299 = vunpack.c.l.b16 %v267
      %v300 = vunpack.c.l.b16 %v268
      %v301 = vunpack.c.l.b16 %v269
      %v302 = vunpack.c.l.b16 %v270
      %v303 = vunpack.c.l.b16 %v271
      %v304 = vunpack.c.l.b16 %v272
      %v305 = vunpack.c.l.b16 %v273
      %v306 = vunpack.c.l.b16 %v274
      %v307 = vunpack.c.l.b16 %v275
      %v308 = vunpack.c.l.b16 %v276
      %v309 = vunpack.c.l.b16 %v277
      %v310 = vunpack.c.l.b16 %v278
      %v311 = vpack.c.b16 %v296, %v295
      %v312 = vpack.c.b16 %v298, %v297
      %v313 = vpack.c.b16 %v300, %v299
      %v314 = vpack.c.b16 %v302, %v301
      %v315 = vpack.c.b16 %v304, %v303
      %v316 = vpack.c.b16 %v306, %v305
      %v317 = vpack.c.b16 %v308, %v307
      %v318 = vpack.c.b16 %v310, %v309
      %327 = vmatprep.subr.bf16.mxu0 0
      %328 = vmatpush1.bf16.msra.mxu0 %v311
      %329 = vmatprep.subr.bf16.mxu0 0
      %330 = vmatpush1.bf16.msra.mxu0 %v312
      %331 = vmatprep.subr.bf16.mxu0 0
      %332 = vmatpush1.bf16.msra.mxu0 %v313
      %333 = vmatprep.subr.bf16.mxu0 0
      %334 = vmatpush1.bf16.msra.mxu0 %v314
      %335 = vmatprep.subr.bf16.mxu0 0
      %336 = vmatpush1.bf16.msra.mxu0 %v315
      %337 = vmatprep.subr.bf16.mxu0 0
      %338 = vmatpush1.bf16.msra.mxu0 %v316
      %339 = vmatprep.subr.bf16.mxu0 0
      %340 = vmatpush1.bf16.msra.mxu0 %v317
      %341 = vmatprep.subr.bf16.mxu0 0
      %342 = vmatpush1.bf16.msra.mxu0 %v318
      %343 = vmatprep.subr.bf16.mxu0 0
      %344 = vmatpush1.bf16.msra.mxu0 0
      %345 = vmatprep.subr.bf16.mxu0 0
      %346 = vmatpush1.bf16.msra.mxu0 0
      %347 = vmatprep.subr.bf16.mxu0 0
      %348 = vmatpush1.bf16.msra.mxu0 0
      %349 = vmatprep.subr.bf16.mxu0 0
      %350 = vmatpush1.bf16.msra.mxu0 0
      %351 = vmatprep.subr.bf16.mxu0 0
      %352 = vmatpush1.bf16.msra.mxu0 0
      %353 = vmatprep.subr.bf16.mxu0 0
      %354 = vmatpush1.bf16.msra.mxu0 0
      %355 = vmatprep.subr.bf16.mxu0 0
      %356 = vmatpush1.bf16.msra.mxu0 0
      %357 = vmatprep.subr.bf16.mxu0 0
      %358 = vmatpush1.bf16.msra.mxu0 0
      %359 = vmatprep.mubr.bf16.mxu0 0
      %360 = vmatmul.mubr.bf16.gmra.mrb[0].mxu0 %v262
      %v361 = vpop.f32.mrb[0].mxu0
      %v362 = vadd.f32 0.0, %v361
      %v363 = vpop.f32.mrb[0].mxu0
      %v364 = vpop.f32.mrb[0].mxu0
      %v365 = vpop.f32.mrb[0].mxu0
      %366 = vdwg.mxu0
      %v367 = vadd.f32 %v261, %v362
      %368 = vst [vmem:[%s254] sm:$0xff] %v367
      // Predicated region
      $region41: #{encoder_forward.8} parent=35 // pred_check
        %p369 = pneg %p256
      $region42: #{encoder_forward.8} parent=35 // pred_check_branch
        %371 = sbr.rel (%p369) target = $region44
      $region43: #{encoder_forward.8} parent=35 // pred_region
        %v372 = vld [vmem:[%s254] sm:$0xff]
        %v373 = vld [vmem:[%s2] sm:$0x1]
        %v374 = vld [vmem:[%s250] sm:$0xff]
        %v376 = vlaneseq
        %v377 = vshrl.u32 %v376, 7
        %v378 = vsub.s32 0, %v377
        %v379 = vrot.slane %v373, %v378
        %v381 = vadd.f32 %v379, %v374
        %v382 = vadd.f32 %v372, %v381
        %383 = vst [vmem:[%s254] sm:$0xff] %v382
      $region44: #{encoder_forward.8} parent=35 // pred_fallthru
        _
      %p384 = scmp.lt.s32.totalorder %s19, 1
      %s385 = scalar_select %p384, %s19, 1
      %s386 = smul.addr %s385, 8
      %s387 = scalar_lea.vmem %s4, %s386
      // Predicated region
      $region45: #{encoder_forward.8} parent=35 // pred_check
        %p388 = pneg %p146
      $region46: #{encoder_forward.8} parent=35 // pred_check_branch
        %390 = sbr.rel (%p388) target = $region48
      $region47: #{encoder_forward.8} parent=35 // pred_region
        _
      $region48: #{encoder_forward.8} parent=35 // pred_fallthru
        _
    $region36: #{encoder_forward.8} parent=5 // pred_fallthru
      _
    %p391 = scmp.le.s32.totalorder 2, %s10
    // Predicated region
    $region49: #{encoder_forward.8} parent=5 // pred_check
      %p392 = pneg %p391
    $region50: #{encoder_forward.8} parent=5 // pred_check_branch
      %394 = sbr.rel (%p392) target = $region52
    $region51: #{encoder_forward.8} parent=5 // pred_region
      %s395 = ssub.s32 %s10, 2
      // Predicated region
      $region53: #{encoder_forward.8} parent=51 // pred_check
        %p396 = pneg %p152
      $region54: #{encoder_forward.8} parent=51 // pred_check_branch
        %398 = sbr.rel (%p396) target = $region56
      $region55: #{encoder_forward.8} parent=51 // pred_region
        %p399 = scmp.lt.s32.totalorder %s21, 1
        %s400 = scalar_select %p399, %s21, 1
        %s401 = smul.addr %s400, 8
        %s402 = scalar_lea.vmem %s4, %s401
      $region56: #{encoder_forward.8} parent=51 // pred_fallthru
        _
    $region52: #{encoder_forward.8} parent=5 // pred_fallthru
      _
  $region6: #{encoder_forward.8} parent=0 // loop_footer
    %s14 = sadd.s32 1, %s10
  $region7: #{encoder_forward.8} parent=0 // loop_footer_branch
    %9 = sbr.rel target = $region3
  $region8: #{encoder_forward.8} parent=0 // loop_exit
    _

// kernel: encoder_forward.9
$region0: #{encoder_forward.9}
  #allocation0 [shape = 'u32[]', space=smem, size = 0x4, offset = 0x4, fixed_abs, tag = 'smem constant byte address 0x4 - core index']
  #allocation1 [shape = 'u32[144,128]{1,0:T(1,128)}', space=vmem, size = 0x12000, scoped, tag = 'internal scratch']
  %s0 = inlined_call_operand.vmem [shape: f32[2,8,32], index: 0, kind: input, shape index: {}]
  %s1 = inlined_call_operand.vmem [shape: f32[2,8,32], index: 1, kind: output, shape index: {}]
  %s2 = sld [smem:[#allocation0]]
  $region37: #{encoder_forward.9} parent=0
    _
  %s4 = ssub.s32 1, %s2
  %s5 = scalar_select 0, %s4, %s2
  loop: start=0, step=1, limit=4
  $region2: #{encoder_forward.9} parent=0 // loop_pre_header
    _
  $region3: #{encoder_forward.9} parent=0 // loop_header
    %s7 = sphi 0, %s11
    %p8 = scmp.ge.s32.totalorder %s7, 4
    %s17 = sphi 0, %s19
    %s20 = sphi 0, %s17
    %s21 = sphi 0, %s20
    %s37 = sphi 0, %s21
    %s43 = sphi 0, %s45
    %s46 = sphi 0, %s43
    %s47 = sphi 0, %s46
    %s63 = sphi 0, %s47
  $region4: #{encoder_forward.9} parent=0 // loop_header_branch
    %10 = sbr.rel (%p8) target = $region8
  $region5: #{encoder_forward.9} parent=0 // loop_body
    %s12 = ssub.s32 %s7, 1
    %s13 = ssub.s32 %s7, 2
    %s14 = sadd.s32 %s7, 1
    %s15 = ssub.s32 %s7, %s14
    %p16 = scmp.eq.s32.totalorder %s15, 0
    %s18 = sadd.s32 %s17, 1
    %s19 = scalar_select %p16, %s17, %s18
    %p22 = pneg %p16
    %p23 = scmp.eq.s32.totalorder %s7, 1
    %p24 = por %p22, %p23
    %p25 = scmp.ne.s32.totalorder %s17, %s20
    %p26 = scmp.eq.s32.totalorder %s7, 0
    %p27 = por %p25, %p26
    %p28 = scmp.ne.s32.totalorder %s17, %s20
    %p29 = scmp.eq.s32.totalorder %s12, 1
    %p30 = por %p28, %p29
    %p31 = scmp.ne.s32.totalorder %s20, %s21
    %p32 = scmp.eq.s32.totalorder %s12, 0
    %p33 = por %p31, %p32
    %p34 = scmp.ne.s32.totalorder %s20, %s21
    %p35 = scmp.eq.s32.totalorder %s13, 1
    %p36 = por %p34, %p35
    %p38 = scmp.ne.s32.totalorder %s21, %s37
    %p39 = scmp.eq.s32.totalorder %s13, 0
    %p40 = por %p38, %p39
    %s41 = ssub.s32 %s7, %s14
    %p42 = scmp.eq.s32.totalorder %s41, 0
    %s44 = sadd.s32 %s43, 1
    %s45 = scalar_select %p42, %s43, %s44
    %p48 = pneg %p42
    %p49 = scmp.eq.s32.totalorder %s7, 1
    %p50 = por %p48, %p49
    %p51 = scmp.ne.s32.totalorder %s43, %s46
    %p52 = scmp.eq.s32.totalorder %s7, 0
    %p53 = por %p51, %p52
    %p54 = scmp.ne.s32.totalorder %s43, %s46
    %p55 = scmp.eq.s32.totalorder %s12, 1
    %p56 = por %p54, %p55
    %p57 = scmp.ne.s32.totalorder %s46, %s47
    %p58 = scmp.eq.s32.totalorder %s12, 0
    %p59 = por %p57, %p58
    %p60 = scmp.ne.s32.totalorder %s46, %s47
    %p61 = scmp.eq.s32.totalorder %s13, 1
    %p62 = por %p60, %p61
    %p64 = scmp.ne.s32.totalorder %s47, %s63
    %p65 = scmp.eq.s32.totalorder %s13, 0
    %p66 = por %p64, %p65
    %p67 = scmp.le.s32.totalorder 1, %s7
    %p68 = scmp.lt.s32.totalorder %s7, 3
    %p69 = pnand %p67, %p68
    %p70 = pneg %p69
    // Predicated region
    $region9: #{encoder_forward.9} parent=5 // pred_check
      _
    $region10: #{encoder_forward.9} parent=5 // pred_check_branch
      %72 = sbr.rel (%p69) target = $region12
    $region11: #{encoder_forward.9} parent=5 // pred_region
      %s73 = ssub.s32 %s7, 1
    $region12: #{encoder_forward.9} parent=5 // pred_fallthru
      _
    %p74 = scmp.lt.s32.totalorder %s7, 2
    // Predicated region
    $region13: #{encoder_forward.9} parent=5 // pred_check
      %p75 = pneg %p74
    $region14: #{encoder_forward.9} parent=5 // pred_check_branch
      %77 = sbr.rel (%p75) target = $region16
    $region15: #{encoder_forward.9} parent=5 // pred_region
      // Predicated region
      $region17: #{encoder_forward.9} parent=15 // pred_check
        %p78 = pneg %p27
      $region18: #{encoder_forward.9} parent=15 // pred_check_branch
        %80 = sbr.rel (%p78) target = $region20
      $region19: #{encoder_forward.9} parent=15 // pred_region
        %p81 = scmp.lt.s32.totalorder %s7, 1
        %s82 = scalar_select %p81, %s7, 1
        %s83 = smul.addr %s82, 8
        %s84 = scalar_lea.vmem %s0, %s83
      $region20: #{encoder_forward.9} parent=15 // pred_fallthru
        _
    $region16: #{encoder_forward.9} parent=5 // pred_fallthru
      _
    %p85 = scmp.le.s32.totalorder 1, %s7
    %p86 = scmp.lt.s32.totalorder %s7, 3
    %p87 = pnand %p85, %p86
    %p88 = pneg %p87
    // Predicated region
    $region21: #{encoder_forward.9} parent=5 // pred_check
      _
    $region22: #{encoder_forward.9} parent=5 // pred_check_branch
      %90 = sbr.rel (%p87) target = $region24
    $region23: #{encoder_forward.9} parent=5 // pred_region
      %s91 = ssub.s32 %s7, 1
      %p92 = scmp.lt.s32.totalorder %s12, 1
      %s93 = scalar_select %p92, %s12, 1
      %s94 = smul.addr %s93, 8
      %s95 = scalar_lea.vmem %s0, %s94
      %p96 = pneg %p33
      %p97 = pneg %p30
      %p98 = pneg %p59
      %p99 = pneg %p56
      %p100 = scmp.lt.s32.totalorder %s12, 1
      %s101 = scalar_select %p100, %s12, 1
      %s102 = smul.addr %s101, 8
      %s103 = scalar_lea.vmem %s1, %s102
      %p104 = scmp.lt.s32.totalorder %s12, 1
      %s105 = scalar_select %p104, %s12, 1
      %s106 = smul.addr %s105, 8
      %s107 = scalar_lea.vmem %s0, %s106
      %p108 = scmp.lt.s32.totalorder %s12, 1
      %s109 = scalar_select %p108, %s12, 1
      %s110 = smul.addr %s109, 8
      %s111 = scalar_lea.vmem %s1, %s110
      %v112 = vld [vmem:[%s107] sm:$0xff]
      %vm113 = vcmask 261120
      %v114 = vsel %vm113, %v112, 0.0
      %115 = vadd.xlane.f32.xlu0 %v114
      %v116 = vpop.xlane.xlu0 %115
      %v117 = vrot.slane %v116, 4
      %v118 = vadd.f32 %v116, %v117
      %v119 = vrot.slane %v118, 2
      %v120 = vadd.f32 %v118, %v119
      %v121 = vrot.slane %v120, 1
      %v122 = vadd.f32 %v120, %v121
      %v123 = vrcp.pop 256.0
      %v124 = vmul.f32 %v122, %v123
      %v125 = vsub.f32 %v112, %v124
      %v126 = vmul.f32 %v125, %v125
      %v127 = vsel %vm113, %v126, 0.0
      %128 = vadd.xlane.f32.xlu0 %v127
      %v129 = vpop.xlane.xlu0 %128
      %v130 = vrot.slane %v129, 4
      %v131 = vadd.f32 %v129, %v130
      %v132 = vrot.slane %v131, 2
      %v133 = vadd.f32 %v131, %v132
      %v134 = vrot.slane %v133, 1
      %v135 = vadd.f32 %v133, %v134
      %v136 = vmul.f32 %v135, %v123
      %v137 = vadd.f32 %v136, 1e-05
      %v138 = vrsqrt.pop %v137
      %v139 = vmul.f32 %v125, %v138
      %140 = vst.msk [vmem:[%s111] sm:$0xff] %vm113, %v139
      %p141 = scmp.lt.s32.totalorder %s12, 1
      %s142 = scalar_select %p141, %s12, 1
      %s143 = smul.addr %s142, 8
      %s144 = scalar_lea.vmem %s1, %s143
      // Predicated region
      $region25: #{encoder_forward.9} parent=23 // pred_check
        %p145 = pneg %p56
      $region26: #{encoder_forward.9} parent=23 // pred_check_branch
        %147 = sbr.rel (%p145) target = $region28
      $region27: #{encoder_forward.9} parent=23 // pred_region
        _
      $region28: #{encoder_forward.9} parent=23 // pred_fallthru
        _
    $region24: #{encoder_forward.9} parent=5 // pred_fallthru
      _
    %p148 = scmp.le.s32.totalorder 2, %s7
    // Predicated region
    $region29: #{encoder_forward.9} parent=5 // pred_check
      %p149 = pneg %p148
    $region30: #{encoder_forward.9} parent=5 // pred_check_branch
      %151 = sbr.rel (%p149) target = $region32
    $region31: #{encoder_forward.9} parent=5 // pred_region
      %s152 = ssub.s32 %s7, 2
      // Predicated region
      $region33: #{encoder_forward.9} parent=31 // pred_check
        %p153 = pneg %p62
      $region34: #{encoder_forward.9} parent=31 // pred_check_branch
        %155 = sbr.rel (%p153) target = $region36
      $region35: #{encoder_forward.9} parent=31 // pred_region
        %p156 = scmp.lt.s32.totalorder %s13, 1
        %s157 = scalar_select %p156, %s13, 1
        %s158 = smul.addr %s157, 8
        %s159 = scalar_lea.vmem %s1, %s158
      $region36: #{encoder_forward.9} parent=31 // pred_fallthru
        _
    $region32: #{encoder_forward.9} parent=5 // pred_fallthru
      _
  $region6: #{encoder_forward.9} parent=0 // loop_footer
    %s11 = sadd.s32 1, %s7
  $region7: #{encoder_forward.9} parent=0 // loop_footer_branch
    %6 = sbr.rel target = $region3
  $region8: #{encoder_forward.9} parent=0 // loop_exit
    _

// kernel: encoder_forward.11
$region0: #{encoder_forward.11}
  #allocation0 [shape = 'u32[]', space=smem, size = 0x4, offset = 0x4, fixed_abs, tag = 'smem constant byte address 0x4 - core index']
  #allocation1 [shape = 'u32[144,128]{1,0:T(1,128)}', space=vmem, size = 0x12000, scoped, tag = 'internal scratch']
  %s0 = inlined_call_operand.vmem [shape: f32[2,8,32], index: 0, kind: input, shape index: {}]
  %s1 = inlined_call_operand.hbm [shape: f32[2,8,32], index: 1, kind: output, shape index: {}]
  %s2 = sld [smem:[#allocation0]]
  $region37: #{encoder_forward.11} parent=0
    _
  %s4 = ssub.s32 1, %s2
  %s5 = scalar_select 0, %s4, %s2
  $region1: #{encoder_forward.11} parent=0
    #allocation2 [shape = 'u8[8192]{0}', space=vmem, size = 0x2000, scoped, tag = 'output window, operand 0']
    #allocation3 [shape = 's32[2]{0}', space=sflag, size = 0x8, scoped, tag = 'scoped memory for encoder_forward.11']
    %6 = vsyncpa [#allocation3], 0
    %s7 = scalar_lea.sflag [#allocation3], 1
    %8 = vsyncpa %s7, 0
    loop: start=0, step=1, limit=4
    $region2: #{encoder_forward.11} parent=1 // loop_pre_header
      _
    $region3: #{encoder_forward.11} parent=1 // loop_header
      %s10 = sphi 0, %s14
      %p11 = scmp.ge.s32.totalorder %s10, 4
      %s20 = sphi 0, %s22
      %s23 = sphi 0, %s20
      %s24 = sphi 0, %s23
      %s40 = sphi 0, %s24
      %s46 = sphi 0, %s48
      %s49 = sphi 0, %s46
      %s50 = sphi 0, %s49
      %s66 = sphi 0, %s50
    $region4: #{encoder_forward.11} parent=1 // loop_header_branch
      %13 = sbr.rel (%p11) target = $region8
    $region5: #{encoder_forward.11} parent=1 // loop_body
      %s15 = ssub.s32 %s10, 1
      %s16 = ssub.s32 %s10, 2
      %s17 = sadd.s32 %s10, 1
      %s18 = ssub.s32 %s10, %s17
      %p19 = scmp.eq.s32.totalorder %s18, 0
      %s21 = sadd.s32 %s20, 1
      %s22 = scalar_select %p19, %s20, %s21
      %p25 = pneg %p19
      %p26 = scmp.eq.s32.totalorder %s10, 1
      %p27 = por %p25, %p26
      %p28 = scmp.ne.s32.totalorder %s20, %s23
      %p29 = scmp.eq.s32.totalorder %s10, 0
      %p30 = por %p28, %p29
      %p31 = scmp.ne.s32.totalorder %s20, %s23
      %p32 = scmp.eq.s32.totalorder %s15, 1
      %p33 = por %p31, %p32
      %p34 = scmp.ne.s32.totalorder %s23, %s24
      %p35 = scmp.eq.s32.totalorder %s15, 0
      %p36 = por %p34, %p35
      %p37 = scmp.ne.s32.totalorder %s23, %s24
      %p38 = scmp.eq.s32.totalorder %s16, 1
      %p39 = por %p37, %p38
      %p41 = scmp.ne.s32.totalorder %s24, %s40
      %p42 = scmp.eq.s32.totalorder %s16, 0
      %p43 = por %p41, %p42
      %s44 = ssub.s32 %s10, %s17
      %p45 = scmp.eq.s32.totalorder %s44, 0
      %s47 = sadd.s32 %s46, 1
      %s48 = scalar_select %p45, %s46, %s47
      %p51 = pneg %p45
      %p52 = scmp.eq.s32.totalorder %s10, 1
      %p53 = por %p51, %p52
      %p54 = scmp.ne.s32.totalorder %s46, %s49
      %p55 = scmp.eq.s32.totalorder %s10, 0
      %p56 = por %p54, %p55
      %p57 = scmp.ne.s32.totalorder %s46, %s49
      %p58 = scmp.eq.s32.totalorder %s15, 1
      %p59 = por %p57, %p58
      %p60 = scmp.ne.s32.totalorder %s49, %s50
      %p61 = scmp.eq.s32.totalorder %s15, 0
      %p62 = por %p60, %p61
      %p63 = scmp.ne.s32.totalorder %s49, %s50
      %p64 = scmp.eq.s32.totalorder %s16, 1
      %p65 = por %p63, %p64
      %p67 = scmp.ne.s32.totalorder %s50, %s66
      %p68 = scmp.eq.s32.totalorder %s16, 0
      %p69 = por %p67, %p68
      %p70 = scmp.le.s32.totalorder 1, %s10
      %p71 = scmp.lt.s32.totalorder %s10, 3
      %p72 = pnand %p70, %p71
      %p73 = pneg %p72
      // Predicated region
      $region9: #{encoder_forward.11} parent=5 // pred_check
        _
      $region10: #{encoder_forward.11} parent=5 // pred_check_branch
        %75 = sbr.rel (%p72) target = $region12
      $region11: #{encoder_forward.11} parent=5 // pred_region
        %s76 = ssub.s32 %s10, 1
      $region12: #{encoder_forward.11} parent=5 // pred_fallthru
        _
      %p77 = scmp.lt.s32.totalorder %s10, 2
      // Predicated region
      $region13: #{encoder_forward.11} parent=5 // pred_check
        %p78 = pneg %p77
      $region14: #{encoder_forward.11} parent=5 // pred_check_branch
        %80 = sbr.rel (%p78) target = $region16
      $region15: #{encoder_forward.11} parent=5 // pred_region
        // Predicated region
        $region17: #{encoder_forward.11} parent=15 // pred_check
          %p81 = pneg %p30
        $region18: #{encoder_forward.11} parent=15 // pred_check_branch
          %83 = sbr.rel (%p81) target = $region20
        $region19: #{encoder_forward.11} parent=15 // pred_region
          %p84 = scmp.lt.s32.totalorder %s10, 1
          %s85 = scalar_select %p84, %s10, 1
          %s86 = smul.addr %s85, 8
          %s87 = scalar_lea.vmem %s0, %s86
        $region20: #{encoder_forward.11} parent=15 // pred_fallthru
          _
      $region16: #{encoder_forward.11} parent=5 // pred_fallthru
        _
      %p88 = scmp.le.s32.totalorder 1, %s10
      %p89 = scmp.lt.s32.totalorder %s10, 3
      %p90 = pnand %p88, %p89
      %p91 = pneg %p90
      // Predicated region
      $region21: #{encoder_forward.11} parent=5 // pred_check
        _
      $region22: #{encoder_forward.11} parent=5 // pred_check_branch
        %93 = sbr.rel (%p90) target = $region24
      $region23: #{encoder_forward.11} parent=5 // pred_region
        %s94 = ssub.s32 %s10, 1
        %p95 = scmp.lt.s32.totalorder %s15, 1
        %s96 = scalar_select %p95, %s15, 1
        %s97 = smul.addr %s96, 8
        %s98 = scalar_lea.vmem %s0, %s97
        %p99 = pneg %p36
        %p100 = pneg %p33
        %p101 = pneg %p62
        %p102 = pneg %p59
        %s103 = sand.u32 %s49, 1
        %s104 = scalar_lea.sflag [#allocation3], %s103
        %s105 = sand.u32 %s49, 1
        %s106 = smul.addr %s105, 8
        %s107 = scalar_lea.vmem [#allocation2], %s106
        %p108 = scmp.lt.s32.totalorder %s15, 1
        %s109 = scalar_select %p108, %s15, 1
        %s110 = smul.addr %s109, 8
        %s111 = scalar_lea.vmem %s0, %s110
        %v112 = vld [vmem:[%s111] sm:$0xff]
        %vm113 = vcmask 261120
        %v114 = vsel %vm113, %v112, 0.0
        %115 = vadd.xlane.f32.xlu0 %v114
        %v116 = vpop.xlane.xlu0 %115
        %v117 = vrot.slane %v116, 4
        %v118 = vadd.f32 %v116, %v117
        %v119 = vrot.slane %v118, 2
        %v120 = vadd.f32 %v118, %v119
        %v121 = vrot.slane %v120, 1
        %v122 = vadd.f32 %v120, %v121
        %v123 = vrcp.pop 256.0
        %v124 = vmul.f32 %v122, %v123
        %v125 = vsub.f32 %v112, %v124
        %v126 = vmul.f32 %v125, %v125
        %v127 = vsel %vm113, %v126, 0.0
        %128 = vadd.xlane.f32.xlu0 %v127
        %v129 = vpop.xlane.xlu0 %128
        %v130 = vrot.slane %v129, 4
        %v131 = vadd.f32 %v129, %v130
        %v132 = vrot.slane %v131, 2
        %v133 = vadd.f32 %v131, %v132
        %v134 = vrot.slane %v133, 1
        %v135 = vadd.f32 %v133, %v134
        %v136 = vmul.f32 %v135, %v123
        %v137 = vadd.f32 %v136, 1e-05
        %v138 = vrsqrt.pop %v137
        %v139 = vmul.f32 %v125, %v138
        %140 = vst.msk [vmem:[%s107] sm:$0xff] %vm113, %v139
        %s141 = sand.u32 %s49, 1
        %s142 = scalar_lea.sflag [#allocation3], %s141
        %s143 = sand.u32 %s49, 1
        %s144 = smul.addr %s143, 8
        %s145 = scalar_lea.vmem [#allocation2], %s144
        // Predicated region
        $region25: #{encoder_forward.11} parent=23 // pred_check
          %p146 = pneg %p59
        $region26: #{encoder_forward.11} parent=23 // pred_check_branch
          %148 = sbr.rel (%p146) target = $region28
        $region27: #{encoder_forward.11} parent=23 // pred_region
          %s150 = ssub.s32 128, 128
          %151 = vsyncadd %s142, %s150
          %s152 = smul.addr %s15, 128
          %s153 = scalar_lea.hbm %s1, %s152
          %s155 = sshll.u32 %s145, 4
          %s156 = int_to_ptr.vmem [resolvable:$true] %s155
          %158 = dma.vmem_to_hbm [thread:$0]  %s156, 128, %s153, %s142
        $region28: #{encoder_forward.11} parent=23 // pred_fallthru
          _
      $region24: #{encoder_forward.11} parent=5 // pred_fallthru
        _
      %p159 = scmp.le.s32.totalorder 2, %s10
      // Predicated region
      $region29: #{encoder_forward.11} parent=5 // pred_check
        %p160 = pneg %p159
      $region30: #{encoder_forward.11} parent=5 // pred_check_branch
        %162 = sbr.rel (%p160) target = $region32
      $region31: #{encoder_forward.11} parent=5 // pred_region
        %s163 = ssub.s32 %s10, 2
        // Predicated region
        $region33: #{encoder_forward.11} parent=31 // pred_check
          %p164 = pneg %p65
        $region34: #{encoder_forward.11} parent=31 // pred_check_branch
          %166 = sbr.rel (%p164) target = $region36
        $region35: #{encoder_forward.11} parent=31 // pred_region
          %s167 = sand.u32 %s50, 1
          %s168 = scalar_lea.sflag [#allocation3], %s167
          %s169 = sand.u32 %s50, 1
          %s170 = smul.addr %s169, 8
          %s171 = scalar_lea.vmem [#allocation2], %s170
          %172 = dma.done %s168, 128
        $region36: #{encoder_forward.11} parent=31 // pred_fallthru
          _
      $region32: #{encoder_forward.11} parent=5 // pred_fallthru
        _
    $region6: #{encoder_forward.11} parent=1 // loop_footer
      %s14 = sadd.s32 1, %s10
    $region7: #{encoder_forward.11} parent=1 // loop_footer_branch
      %9 = sbr.rel target = $region3
    $region8: #{encoder_forward.11} parent=1 // loop_exit
      _
    %173 = vsyncpa [#allocation3], 1
    %s174 = scalar_lea.sflag [#allocation3], 1
    %175 = vsyncpa %s174, 1

// kernel: encoder_forward.10
$region0: #{encoder_forward.10}
  #allocation0 [shape = 'u32[]', space=smem, size = 0x4, offset = 0x4, fixed_abs, tag = 'smem constant byte address 0x4 - core index']
  #allocation1 [shape = 'u32[144,128]{1,0:T(1,128)}', space=vmem, size = 0x12000, scoped, tag = 'internal scratch']
  %s0 = inlined_call_operand.vmem [shape: f32[16,128], index: 0, kind: input, shape index: {}]
  %s1 = inlined_call_operand.vmem [shape: bf16[128,128], index: 1, kind: input, shape index: {}]
  %s2 = inlined_call_operand.vmem [shape: f32[1,128], index: 2, kind: input, shape index: {}]
  %s3 = inlined_call_operand.vmem [shape: bf16[128,128], index: 3, kind: input, shape index: {}]
  %s4 = inlined_call_operand.vmem [shape: f32[1,128], index: 4, kind: input, shape index: {}]
  %s5 = inlined_call_operand.vmem [shape: f32[16,128], index: 5, kind: output, shape index: {}]
  %s6 = sld [smem:[#allocation0]]
  $region61: #{encoder_forward.10} parent=0
    _
  %s8 = ssub.s32 1, %s6
  %s9 = scalar_select 0, %s8, %s6
  loop: start=0, step=1, limit=4
  $region2: #{encoder_forward.10} parent=0 // loop_pre_header
    _
  $region3: #{encoder_forward.10} parent=0 // loop_header
    %s11 = sphi 0, %s15
    %p12 = scmp.ge.s32.totalorder %s11, 4
    %s18 = sphi 0, %s30
    %s19 = sphi 0, %s26
    %s20 = sphi 0, %s18
    %s21 = sphi 0, %s19
    %s22 = sphi 0, %s20
    %s23 = sphi 0, %s21
    %s33 = sphi 0, %s35
    %s36 = sphi 0, %s33
    %s37 = sphi 0, %s36
    %s53 = sphi 0, %s37
    %s59 = sphi 0, %s61
    %s62 = sphi 0, %s59
    %s63 = sphi 0, %s62
    %s79 = sphi 0, %s63
    %s85 = sphi 0, %s87
    %s88 = sphi 0, %s85
    %s89 = sphi 0, %s88
    %s105 = sphi 0, %s89
    %s111 = sphi 0, %s113
    %s114 = sphi 0, %s111
    %s115 = sphi 0, %s114
    %s131 = sphi 0, %s115
    %s135 = sphi 0, %s135
    %s137 = sphi 0, %s135
    %s138 = sphi 0, %s137
    %s152 = sphi 0, %s138
    %s158 = sphi 0, %s160
    %s161 = sphi 0, %s158
    %s162 = sphi 0, %s161
    %s178 = sphi 0, %s162
  $region4: #{encoder_forward.10} parent=0 // loop_header_branch
    %14 = sbr.rel (%p12) target = $region8
  $region5: #{encoder_forward.10} parent=0 // loop_body
    %s16 = ssub.s32 %s11, 1
    %s17 = ssub.s32 %s11, 2
    %s24 = sadd.s32 1, %s19
    %p25 = scmp.ge.s32.totalorder %s24, 1
    %s26 = scalar_select %p25, 0, %s24
    %s27 = sadd.s32 1, %s18
    %s28 = scalar_select %p25, %s27, %s18
    %p29 = scmp.ge.s32.totalorder %s28, 2
    %s30 = scalar_select %p29, 0, %s28
    %s31 = ssub.s32 %s18, %s30
    %p32 = scmp.eq.s32.totalorder %s31, 0
    %s34 = sadd.s32 %s33, 1
    %s35 = scalar_select %p32, %s33, %s34
    %p38 = pneg %p32
    %p39 = scmp.eq.s32.totalorder %s11, 1
    %p40 = por %p38, %p39
    %p41 = scmp.ne.s32.totalorder %s33, %s36
    %p42 = scmp.eq.s32.totalorder %s11, 0
    %p43 = por %p41, %p42
    %p44 = scmp.ne.s32.totalorder %s33, %s36
    %p45 = scmp.eq.s32.totalorder %s16, 1
    %p46 = por %p44, %p45
    %p47 = scmp.ne.s32.totalorder %s36, %s37
    %p48 = scmp.eq.s32.totalorder %s16, 0
    %p49 = por %p47, %p48
    %p50 = scmp.ne.s32.totalorder %s36, %s37
    %p51 = scmp.eq.s32.totalorder %s17, 1
    %p52 = por %p50, %p51
    %p54 = scmp.ne.s32.totalorder %s37, %s53
    %p55 = scmp.eq.s32.totalorder %s17, 0
    %p56 = por %p54, %p55
    %s57 = ssub.s32 %s19, %s26
    %p58 = scmp.eq.s32.totalorder %s57, 0
    %s60 = sadd.s32 %s59, 1
    %s61 = scalar_select %p58, %s59, %s60
    %p64 = pneg %p58
    %p65 = scmp.eq.s32.totalorder %s11, 1
    %p66 = por %p64, %p65
    %p67 = scmp.ne.s32.totalorder %s59, %s62
    %p68 = scmp.eq.s32.totalorder %s11, 0
    %p69 = por %p67, %p68
    %p70 = scmp.ne.s32.totalorder %s59, %s62
    %p71 = scmp.eq.s32.totalorder %s16, 1
    %p72 = por %p70, %p71
    %p73 = scmp.ne.s32.totalorder %s62, %s63
    %p74 = scmp.eq.s32.totalorder %s16, 0
    %p75 = por %p73, %p74
    %p76 = scmp.ne.s32.totalorder %s62, %s63
    %p77 = scmp.eq.s32.totalorder %s17, 1
    %p78 = por %p76, %p77
    %p80 = scmp.ne.s32.totalorder %s63, %s79
    %p81 = scmp.eq.s32.totalorder %s17, 0
    %p82 = por %p80, %p81
    %s83 = ssub.s32 %s19, %s26
    %p84 = scmp.eq.s32.totalorder %s83, 0
    %s86 = sadd.s32 %s85, 1
    %s87 = scalar_select %p84, %s85, %s86
    %p90 = pneg %p84
    %p91 = scmp.eq.s32.totalorder %s11, 1
    %p92 = por %p90, %p91
    %p93 = scmp.ne.s32.totalorder %s85, %s88
    %p94 = scmp.eq.s32.totalorder %s11, 0
    %p95 = por %p93, %p94
    %p96 = scmp.ne.s32.totalorder %s85, %s88
    %p97 = scmp.eq.s32.totalorder %s16, 1
    %p98 = por %p96, %p97
    %p99 = scmp.ne.s32.totalorder %s88, %s89
    %p100 = scmp.eq.s32.totalorder %s16, 0
    %p101 = por %p99, %p100
    %p102 = scmp.ne.s32.totalorder %s88, %s89
    %p103 = scmp.eq.s32.totalorder %s17, 1
    %p104 = por %p102, %p103
    %p106 = scmp.ne.s32.totalorder %s89, %s105
    %p107 = scmp.eq.s32.totalorder %s17, 0
    %p108 = por %p106, %p107
    %s109 = ssub.s32 %s19, %s26
    %p110 = scmp.eq.s32.totalorder %s109, 0
    %s112 = sadd.s32 %s111, 1
    %s113 = scalar_select %p110, %s111, %s112
    %p116 = pneg %p110
    %p117 = scmp.eq.s32.totalorder %s11, 1
    %p118 = por %p116, %p117
    %p119 = scmp.ne.s32.totalorder %s111, %s114
    %p120 = scmp.eq.s32.totalorder %s11, 0
    %p121 = por %p119, %p120
    %p122 = scmp.ne.s32.totalorder %s111, %s114
    %p123 = scmp.eq.s32.totalorder %s16, 1
    %p124 = por %p122, %p123
    %p125 = scmp.ne.s32.totalorder %s114, %s115
    %p126 = scmp.eq.s32.totalorder %s16, 0
    %p127 = por %p125, %p126
    %p128 = scmp.ne.s32.totalorder %s114, %s115
    %p129 = scmp.eq.s32.totalorder %s17, 1
    %p130 = por %p128, %p129
    %p132 = scmp.ne.s32.totalorder %s115, %s131
    %p133 = scmp.eq.s32.totalorder %s17, 0
    %p134 = por %p132, %p133
    %s136 = sadd.s32 %s135, 1
    %p139 = scmp.eq.s32.totalorder %s11, 1
    %p140 = scmp.ne.s32.totalorder %s135, %s137
    %p141 = scmp.eq.s32.totalorder %s11, 0
    %p142 = por %p140, %p141
    %p143 = scmp.ne.s32.totalorder %s135, %s137
    %p144 = scmp.eq.s32.totalorder %s16, 1
    %p145 = por %p143, %p144
    %p146 = scmp.ne.s32.totalorder %s137, %s138
    %p147 = scmp.eq.s32.totalorder %s16, 0
    %p148 = por %p146, %p147
    %p149 = scmp.ne.s32.totalorder %s137, %s138
    %p150 = scmp.eq.s32.totalorder %s17, 1
    %p151 = por %p149, %p150
    %p153 = scmp.ne.s32.totalorder %s138, %s152
    %p154 = scmp.eq.s32.totalorder %s17, 0
    %p155 = por %p153, %p154
    %s156 = ssub.s32 %s18, %s30
    %p157 = scmp.eq.s32.totalorder %s156, 0
    %s159 = sadd.s32 %s158, 1
    %s160 = scalar_select %p157, %s158, %s159
    %p163 = pneg %p157
    %p164 = scmp.eq.s32.totalorder %s11, 1
    %p165 = por %p163, %p164
    %p166 = scmp.ne.s32.totalorder %s158, %s161
    %p167 = scmp.eq.s32.totalorder %s11, 0
    %p168 = por %p166, %p167
    %p169 = scmp.ne.s32.totalorder %s158, %s161
    %p170 = scmp.eq.s32.totalorder %s16, 1
    %p171 = por %p169, %p170
    %p172 = scmp.ne.s32.totalorder %s161, %s162
    %p173 = scmp.eq.s32.totalorder %s16, 0
    %p174 = por %p172, %p173
    %p175 = scmp.ne.s32.totalorder %s161, %s162
    %p176 = scmp.eq.s32.totalorder %s17, 1
    %p177 = por %p175, %p176
    %p179 = scmp.ne.s32.totalorder %s162, %s178
    %p180 = scmp.eq.s32.totalorder %s17, 0
    %p181 = por %p179, %p180
    %p182 = scmp.le.s32.totalorder 1, %s11
    %p183 = scmp.lt.s32.totalorder %s11, 3
    %p184 = pnand %p182, %p183
    %p185 = pneg %p184
    // Predicated region
    $region9: #{encoder_forward.10} parent=5 // pred_check
      _
    $region10: #{encoder_forward.10} parent=5 // pred_check_branch
      %187 = sbr.rel (%p184) target = $region12
    $region11: #{encoder_forward.10} parent=5 // pred_region
      %s188 = ssub.s32 %s11, 1
      // Predicated region
      $region13: #{encoder_forward.10} parent=11 // pred_check
        %p189 = pneg %p75
      $region14: #{encoder_forward.10} parent=11 // pred_check_branch
        %191 = sbr.rel (%p189) target = $region16
      $region15: #{encoder_forward.10} parent=11 // pred_region
        %p192 = scmp.lt.s32.totalorder %s21, 0
        %s193 = scalar_select %p192, %s21, 0
        %s194 = smul.addr %s193, 4
        %s195 = scalar_lea.vmem %s1, %s194
      $region16: #{encoder_forward.10} parent=11 // pred_fallthru
        _
      // Predicated region
      $region17: #{encoder_forward.10} parent=11 // pred_check
        %p196 = pneg %p101
      $region18: #{encoder_forward.10} parent=11 // pred_check_branch
        %198 = sbr.rel (%p196) target = $region20
      $region19: #{encoder_forward.10} parent=11 // pred_region
        %p199 = scmp.lt.s32.totalorder %s21, 0
        %s200 = scalar_select %p199, %s21, 0
        %s201 = scalar_lea.vmem %s2, %s200
      $region20: #{encoder_forward.10} parent=11 // pred_fallthru
        _
      // Predicated region
      $region21: #{encoder_forward.10} parent=11 // pred_check
        %p202 = pneg %p127
      $region22: #{encoder_forward.10} parent=11 // pred_check_branch
        %204 = sbr.rel (%p202) target = $region24
      $region23: #{encoder_forward.10} parent=11 // pred_region
        %s205 = smul.u32 16, %s21
        %p206 = scmp.lt.s32.totalorder %s205, 15
        %s207 = scalar_select %p206, %s205, 15
        %s208 = smul.addr %s207, 4
        %s209 = scalar_lea.vmem %s3, %s208
        %s210 = smul.u32 16, %s21
      $region24: #{encoder_forward.10} parent=11 // pred_fallthru
        _
      // Predicated region
      $region25: #{encoder_forward.10} parent=11 // pred_check
        %p211 = pneg %p148
      $region26: #{encoder_forward.10} parent=11 // pred_check_branch
        %213 = sbr.rel (%p211) target = $region28
      $region27: #{encoder_forward.10} parent=11 // pred_region
        _
      $region28: #{encoder_forward.10} parent=11 // pred_fallthru
        _
    $region12: #{encoder_forward.10} parent=5 // pred_fallthru
      _
    %p214 = scmp.lt.s32.totalorder %s11, 2
    // Predicated region
    $region29: #{encoder_forward.10} parent=5 // pred_check
      %p215 = pneg %p214
    $region30: #{encoder_forward.10} parent=5 // pred_check_branch
      %217 = sbr.rel (%p215) target = $region32
    $region31: #{encoder_forward.10} parent=5 // pred_region
      // Predicated region
      $region33: #{encoder_forward.10} parent=31 // pred_check
        %p218 = pneg %p43
      $region34: #{encoder_forward.10} parent=31 // pred_check_branch
        %220 = sbr.rel (%p218) target = $region36
      $region35: #{encoder_forward.10} parent=31 // pred_region
        %p221 = scmp.lt.s32.totalorder %s18, 1
        %s222 = scalar_select %p221, %s18, 1
        %s223 = smul.addr %s222, 8
        %s224 = scalar_lea.vmem %s0, %s223
      $region36: #{encoder_forward.10} parent=31 // pred_fallthru
        _
    $region32: #{encoder_forward.10} parent=5 // pred_fallthru
      _
    %p225 = scmp.le.s32.totalorder 1, %s11
    %p226 = scmp.lt.s32.totalorder %s11, 3
    %p227 = pnand %p225, %p226
    %p228 = pneg %p227
    // Predicated region
    $region37: #{encoder_forward.10} parent=5 // pred_check
      _
    $region38: #{encoder_forward.10} parent=5 // pred_check_branch
      %230 = sbr.rel (%p227) target = $region40
    $region39: #{encoder_forward.10} parent=5 // pred_region
      %s231 = ssub.s32 %s11, 1
      %p232 = scmp.lt.s32.totalorder %s20, 1
      %s233 = scalar_select %p232, %s20, 1
      %s234 = smul.addr %s233, 8
      %s235 = scalar_lea.vmem %s0, %s234
      %p236 = pneg %p49
      %p237 = pneg %p46
      %p238 = scmp.lt.s32.totalorder %s21, 0
      %s239 = scalar_select %p238, %s21, 0
      %s240 = smul.addr %s239, 4
      %s241 = scalar_lea.vmem %s1, %s240
      %p242 = pneg %p75
      %p243 = pneg %p72
      %p244 = scmp.lt.s32.totalorder %s21, 0
      %s245 = scalar_select %p244, %s21, 0
      %s246 = scalar_lea.vmem %s2, %s245
      %p247 = pneg %p101
      %p248 = pneg %p98
      %s249 = smul.u32 16, %s21
      %p250 = scmp.lt.s32.totalorder %s249, 15
      %s251 = scalar_select %p250, %s249, 15
      %s252 = smul.addr %s251, 4
      %s253 = scalar_lea.vmem %s3, %s252
      %p254 = pneg %p127
      %p255 = pneg %p124
      %p256 = pneg %p148
      %p257 = pneg %p145
      %p258 = pneg %p174
      %p259 = pneg %p171
      %p260 = scmp.lt.s32.totalorder %s20, 1
      %s261 = scalar_select %p260, %s20, 1
      %s262 = smul.addr %s261, 8
      %s263 = scalar_lea.vmem %s5, %s262
      %p264 = scmp.lt.s32.totalorder %s20, 1
      %s265 = scalar_select %p264, %s20, 1
      %s266 = smul.addr %s265, 8
      %s267 = scalar_lea.vmem %s0, %s266
      %p268 = scmp.lt.s32.totalorder %s21, 0
      %s269 = scalar_select %p268, %s21, 0
      %s270 = smul.addr %s269, 4
      %s271 = scalar_lea.vmem %s1, %s270
      %p272 = scmp.lt.s32.totalorder %s21, 0
      %s273 = scalar_select %p272, %s21, 0
      %s274 = scalar_lea.vmem %s2, %s273
      %s275 = smul.u32 16, %s21
      %p276 = scmp.lt.s32.totalorder %s275, 15
      %s277 = scalar_select %p276, %s275, 15
      %s278 = smul.addr %s277, 4
      %s279 = scalar_lea.vmem %s3, %s278
      %s280 = smul.u32 16, %s21
      %p281 = scmp.lt.s32.totalorder %s20, 1
      %s282 = scalar_select %p281, %s20, 1
      %s283 = smul.addr %s282, 8
      %s284 = scalar_lea.vmem %s5, %s283
      %p286 = scmp.eq.s32.totalorder %s21, 0
      // Predicated region
      $region41: #{encoder_forward.10} parent=39 // pred_check
        %p287 = pneg %p286
      $region42: #{encoder_forward.10} parent=39 // pred_check_branch
        %289 = sbr.rel (%p287) target = $region44
      $region43: #{encoder_forward.10} parent=39 // pred_region
        %290 = vst [vmem:[%s284] sm:$0xff] 0.0
      $region44: #{encoder_forward.10} parent=39 // pred_fallthru
        _
      %v291 = vld [vmem:[%s267] sm:$0xff]
      %v292 = vpack.c.bf16 %v291, %v291
      %v293 = vld [vmem:[%s271] sm:$0xf]
      %v294 = vld [vmem:[%s271 + $0x4] sm:$0xf]
      %v295 = vld [vmem:[%s271 + $0x8] sm:$0xf]
      %v296 = vld [vmem:[%s271 + $0xc] sm:$0xf]
      %v297 = vld [vmem:[%s271 + $0x10] sm:$0xf]
      %v298 = vld [vmem:[%s271 + $0x14] sm:$0xf]
      %v299 = vld [vmem:[%s271 + $0x18] sm:$0xf]
      %v300 = vld [vmem:[%s271 + $0x1c] sm:$0xf]
      %v301 = vld [vmem:[%s271 + $0x20] sm:$0xf]
      %v302 = vld [vmem:[%s271 + $0x24] sm:$0xf]
      %v303 = vld [vmem:[%s271 + $0x28] sm:$0xf]
      %v304 = vld [vmem:[%s271 + $0x2c] sm:$0xf]
      %v305 = vld [vmem:[%s271 + $0x30] sm:$0xf]
      %v306 = vld [vmem:[%s271 + $0x34] sm:$0xf]
      %v307 = vld [vmem:[%s271 + $0x38] sm:$0xf]
      %v308 = vld [vmem:[%s271 + $0x3c] sm:$0xf]
      %v309 = vld [vmem:[%s274] sm:$0x1]
      %v311 = vlaneseq
      %v312 = vshrl.u32 %v311, 7
      %v313 = vsub.s32 0, %v312
      %v314 = vrot.slane %v309, %v313
      %v332 = vunpack.c.l.b16 %v293
      %v333 = vunpack.c.l.b16 %v294
      %v334 = vunpack.c.l.b16 %v295
      %v335 = vunpack.c.l.b16 %v296
      %v336 = vunpack.c.l.b16 %v297
      %v337 = vunpack.c.l.b16 %v298
      %v338 = vunpack.c.l.b16 %v299
      %v339 = vunpack.c.l.b16 %v300
      %v340 = vunpack.c.l.b16 %v301
      %v341 = vunpack.c.l.b16 %v302
      %v342 = vunpack.c.l.b16 %v303
      %v343 = vunpack.c.l.b16 %v304
      %v344 = vunpack.c.l.b16 %v305
      %v345 = vunpack.c.l.b16 %v306
      %v346 = vunpack.c.l.b16 %v307
      %v347 = vunpack.c.l.b16 %v308
      %v348 = vpack.c.b16 %v333, %v332
      %v349 = vpack.c.b16 %v335, %v334
      %v350 = vpack.c.b16 %v337, %v336
      %v351 = vpack.c.b16 %v339, %v338
      %v352 = vpack.c.b16 %v341, %v340
      %v353 = vpack.c.b16 %v343, %v342
      %v354 = vpack.c.b16 %v345, %v344
      %v355 = vpack.c.b16 %v347, %v346
      %364 = vmatprep.subr.bf16.mxu0 0
      %365 = vmatpush1.bf16.msra.mxu0 %v348
      %366 = vmatprep.subr.bf16.mxu0 0
      %367 = vmatpush1.bf16.msra.mxu0 %v349
      %368 = vmatprep.subr.bf16.mxu0 0
      %369 = vmatpush1.bf16.msra.mxu0 %v350
      %370 = vmatprep.subr.bf16.mxu0 0
      %371 = vmatpush1.bf16.msra.mxu0 %v351
      %372 = vmatprep.subr.bf16.mxu0 0
      %373 = vmatpush1.bf16.msra.mxu0 %v352
      %374 = vmatprep.subr.bf16.mxu0 0
      %375 = vmatpush1.bf16.msra.mxu0 %v353
      %376 = vmatprep.subr.bf16.mxu0 0
      %377 = vmatpush1.bf16.msra.mxu0 %v354
      %378 = vmatprep.subr.bf16.mxu0 0
      %379 = vmatpush1.bf16.msra.mxu0 %v355
      %380 = vmatprep.subr.bf16.mxu0 0
      %381 = vmatpush1.bf16.msra.mxu0 0
      %382 = vmatprep.subr.bf16.mxu0 0
      %383 = vmatpush1.bf16.msra.mxu0 0
      %384 = vmatprep.subr.bf16.mxu0 0
      %385 = vmatpush1.bf16.msra.mxu0 0
      %386 = vmatprep.subr.bf16.mxu0 0
      %387 = vmatpush1.bf16.msra.mxu0 0
      %388 = vmatprep.subr.bf16.mxu0 0
      %389 = vmatpush1.bf16.msra.mxu0 0
      %390 = vmatprep.subr.bf16.mxu0 0
      %391 = vmatpush1.bf16.msra.mxu0 0
      %392 = vmatprep.subr.bf16.mxu0 0
      %393 = vmatpush1.bf16.msra.mxu0 0
      %394 = vmatprep.subr.bf16.mxu0 0
      %395 = vmatpush1.bf16.msra.mxu0 0
      %396 = vmatprep.mubr.bf16.mxu0 0
      %397 = vmatmul.mubr.bf16.gmra.mrb[0].mxu0 %v292
      %v398 = vpop.f32.mrb[0].mxu0
      %v399 = vadd.f32 %v314, %v398
      %v400 = vpop.f32.mrb[0].mxu0
      %v401 = vpop.f32.mrb[0].mxu0
      %v402 = vpop.f32.mrb[0].mxu0
      %403 = vdwg.mxu0
      %v404 = vmax.f32 %v399, 0.0
      %v405 = vld [vmem:[%s284] sm:$0xff]
      %v406 = vpack.c.bf16 %v404, %v404
      %v407 = vld [vmem:[%s279] sm:$0xf]
      %v408 = vld [vmem:[%s279 + $0x4] sm:$0xf]
      %v409 = vld [vmem:[%s279 + $0x8] sm:$0xf]
      %v410 = vld [vmem:[%s279 + $0xc] sm:$0xf]
      %v411 = vld [vmem:[%s279 + $0x10] sm:$0xf]
      %v412 = vld [vmem:[%s279 + $0x14] sm:$0xf]
      %v413 = vld [vmem:[%s279 + $0x18] sm:$0xf]
      %v414 = vld [vmem:[%s279 + $0x1c] sm:$0xf]
      %v415 = vld [vmem:[%s279 + $0x20] sm:$0xf]
      %v416 = vld [vmem:[%s279 + $0x24] sm:$0xf]
      %v417 = vld [vmem:[%s279 + $0x28] sm:$0xf]
      %v418 = vld [vmem:[%s279 + $0x2c] sm:$0xf]
      %v419 = vld [vmem:[%s279 + $0x30] sm:$0xf]
      %v420 = vld [vmem:[%s279 + $0x34] sm:$0xf]
      %v421 = vld [vmem:[%s279 + $0x38] sm:$0xf]
      %v422 = vld [vmem:[%s279 + $0x3c] sm:$0xf]
      %v439 = vunpack.c.l.b16 %v407
      %v440 = vunpack.c.l.b16 %v408
      %v441 = vunpack.c.l.b16 %v409
      %v442 = vunpack.c.l.b16 %v410
      %v443 = vunpack.c.l.b16 %v411
      %v444 = vunpack.c.l.b16 %v412
      %v445 = vunpack.c.l.b16 %v413
      %v446 = vunpack.c.l.b16 %v414
      %v447 = vunpack.c.l.b16 %v415
      %v448 = vunpack.c.l.b16 %v416
      %v449 = vunpack.c.l.b16 %v417
      %v450 = vunpack.c.l.b16 %v418
      %v451 = vunpack.c.l.b16 %v419
      %v452 = vunpack.c.l.b16 %v420
      %v453 = vunpack.c.l.b16 %v421
      %v454 = vunpack.c.l.b16 %v422
      %v455 = vpack.c.b16 %v440, %v439
      %v456 = vpack.c.b16 %v442, %v441
      %v457 = vpack.c.b16 %v444, %v443
      %v458 = vpack.c.b16 %v446, %v445
      %v459 = vpack.c.b16 %v448, %v447
      %v460 = vpack.c.b16 %v450, %v449
      %v461 = vpack.c.b16 %v452, %v451
      %v462 = vpack.c.b16 %v454, %v453
      %471 = vmatprep.subr.bf16.mxu0 0
      %472 = vmatpush1.bf16.msra.mxu0 %v455
      %473 = vmatprep.subr.bf16.mxu0 0
      %474 = vmatpush1.bf16.msra.mxu0 %v456
      %475 = vmatprep.subr.bf16.mxu0 0
      %476 = vmatpush1.bf16.msra.mxu0 %v457
      %477 = vmatprep.subr.bf16.mxu0 0
      %478 = vmatpush1.bf16.msra.mxu0 %v458
      %479 = vmatprep.subr.bf16.mxu0 0
      %480 = vmatpush1.bf16.msra.mxu0 %v459
      %481 = vmatprep.subr.bf16.mxu0 0
      %482 = vmatpush1.bf16.msra.mxu0 %v460
      %483 = vmatprep.subr.bf16.mxu0 0
      %484 = vmatpush1.bf16.msra.mxu0 %v461
      %485 = vmatprep.subr.bf16.mxu0 0
      %486 = vmatpush1.bf16.msra.mxu0 %v462
      %487 = vmatprep.subr.bf16.mxu0 0
      %488 = vmatpush1.bf16.msra.mxu0 0
      %489 = vmatprep.subr.bf16.mxu0 0
      %490 = vmatpush1.bf16.msra.mxu0 0
      %491 = vmatprep.subr.bf16.mxu0 0
      %492 = vmatpush1.bf16.msra.mxu0 0
      %493 = vmatprep.subr.bf16.mxu0 0
      %494 = vmatpush1.bf16.msra.mxu0 0
      %495 = vmatprep.subr.bf16.mxu0 0
      %496 = vmatpush1.bf16.msra.mxu0 0
      %497 = vmatprep.subr.bf16.mxu0 0
      %498 = vmatpush1.bf16.msra.mxu0 0
      %499 = vmatprep.subr.bf16.mxu0 0
      %500 = vmatpush1.bf16.msra.mxu0 0
      %501 = vmatprep.subr.bf16.mxu0 0
      %502 = vmatpush1.bf16.msra.mxu0 0
      %503 = vmatprep.mubr.bf16.mxu0 0
      %504 = vmatmul.mubr.bf16.gmra.mrb[0].mxu0 %v406
      %v505 = vpop.f32.mrb[0].mxu0
      %v506 = vadd.f32 0.0, %v505
      %v507 = vpop.f32.mrb[0].mxu0
      %v508 = vpop.f32.mrb[0].mxu0
      %v509 = vpop.f32.mrb[0].mxu0
      %510 = vdwg.mxu0
      %v511 = vadd.f32 %v405, %v506
      %512 = vst [vmem:[%s284] sm:$0xff] %v511
      // Predicated region
      $region45: #{encoder_forward.10} parent=39 // pred_check
        %p513 = pneg %p286
      $region46: #{encoder_forward.10} parent=39 // pred_check_branch
        %515 = sbr.rel (%p513) target = $region48
      $region47: #{encoder_forward.10} parent=39 // pred_region
        %v516 = vld [vmem:[%s284] sm:$0xff]
        %v517 = vld [vmem:[%s4] sm:$0x1]
        %v518 = vld [vmem:[%s267] sm:$0xff]
        %v520 = vlaneseq
        %v521 = vshrl.u32 %v520, 7
        %v522 = vsub.s32 0, %v521
        %v523 = vrot.slane %v517, %v522
        %v525 = vadd.f32 %v523, %v518
        %v526 = vadd.f32 %v516, %v525
        %527 = vst [vmem:[%s284] sm:$0xff] %v526
      $region48: #{encoder_forward.10} parent=39 // pred_fallthru
        _
      %p528 = scmp.lt.s32.totalorder %s20, 1
      %s529 = scalar_select %p528, %s20, 1
      %s530 = smul.addr %s529, 8
      %s531 = scalar_lea.vmem %s5, %s530
      // Predicated region
      $region49: #{encoder_forward.10} parent=39 // pred_check
        %p532 = pneg %p171
      $region50: #{encoder_forward.10} parent=39 // pred_check_branch
        %534 = sbr.rel (%p532) target = $region52
      $region51: #{encoder_forward.10} parent=39 // pred_region
        _
      $region52: #{encoder_forward.10} parent=39 // pred_fallthru
        _
    $region40: #{encoder_forward.10} parent=5 // pred_fallthru
      _
    %p535 = scmp.le.s32.totalorder 2, %s11
    // Predicated region
    $region53: #{encoder_forward.10} parent=5 // pred_check
      %p536 = pneg %p535
    $region54: #{encoder_forward.10} parent=5 // pred_check_branch
      %538 = sbr.rel (%p536) target = $region56
    $region55: #{encoder_forward.10} parent=5 // pred_region
      %s539 = ssub.s32 %s11, 2
      // Predicated region
      $region57: #{encoder_forward.10} parent=55 // pred_check
        %p540 = pneg %p177
      $region58: #{encoder_forward.10} parent=55 // pred_check_branch
        %542 = sbr.rel (%p540) target = $region60
      $region59: #{encoder_forward.10} parent=55 // pred_region
        %p543 = scmp.lt.s32.totalorder %s22, 1
        %s544 = scalar_select %p543, %s22, 1
        %s545 = smul.addr %s544, 8
        %s546 = scalar_lea.vmem %s5, %s545
      $region60: #{encoder_forward.10} parent=55 // pred_fallthru
        _
    $region56: #{encoder_forward.10} parent=5 // pred_fallthru
      _
  $region6: #{encoder_forward.10} parent=0 // loop_footer
    %s15 = sadd.s32 1, %s11
  $region7: #{encoder_forward.10} parent=0 // loop_footer_branch
    %10 = sbr.rel target = $region3
  $region8: #{encoder_forward.10} parent=0 // loop_exit
    _

</llo_original>
